<compile_context>
chip_gen: v5e
topology: v5e:2x2
jax: 0.10.0
libtpu: 0.0.40
codegen_flags: <defaults>
</compile_context>

<pallas_src>
import functools

import jax
import jax.numpy as jnp
from jax import lax
from jax.experimental import pallas as pl


# ---------------------------------------------------------------------------
# helpers
# ---------------------------------------------------------------------------
def _round_up(v, m):
    return ((v + m - 1) // m) * m


def _full_spec(shape):
    """Whole array as one VMEM block (no grid)."""
    nd = len(shape)
    return pl.BlockSpec(shape, lambda *_, _nd=nd: (0,) * _nd)


def _pad2(a, rows, cols):
    return jnp.pad(a, ((0, rows - a.shape[0]), (0, cols - a.shape[1])))


# ---------------------------------------------------------------------------
# fused forward kernel: encoders + n_layers GINE layers + pool + fc_out
# ---------------------------------------------------------------------------
def _gin_forward_kernel(x_ref, ea_ref, att_ref, asrc_ref, adst_ref, pool_ref,
                        nw_ref, nb_ref, ew_ref, eb_ref,
                        w1s_ref, b1s_ref, w2s_ref, b2s_ref,
                        fcw_ref, fcb_ref,
                        logits_ref, pooled_ref):
    f32 = jnp.float32

    # --- node / edge encoders (Linear): y = x @ W + b ---------------------
    h = jnp.dot(x_ref[...], nw_ref[...], preferred_element_type=f32) + nb_ref[...]
    ea = jnp.dot(ea_ref[...], ew_ref[...], preferred_element_type=f32) + eb_ref[...]

    # one-hot operators: stored bf16 (exact 0/1), compute in f32
    a_src = asrc_ref[...].astype(f32)   # [E, N]  gather  (x_j = A_src @ h)
    a_dst = adst_ref[...].astype(f32)   # [E, N]  scatter (contract E in-kernel, no transpose)
    att = att_ref[...]                  # [E, 1]  edge attention

    n_layers = w1s_ref.shape[0]
    for i in range(n_layers):           # static unroll (n_layers is small)
        # GINEConv message + scatter-add aggregation
        x_src = jnp.dot(a_src, h, preferred_element_type=f32)            # [E, H]
        msg = jnp.maximum(x_src + ea, 0.0) * att                         # relu(x_j + e) * atten
        aggr = lax.dot_general(a_dst, msg, (((0,), (0,)), ((), ())),
                               preferred_element_type=f32)               # [N, H]
        z = aggr + h                     # (1 + eps) * x with eps = 0 (PyG default, not trainable)

        # MLP: Linear1 (eval BatchNorm folded in) -> ReLU -> Linear2, then outer ReLU
        h1 = jnp.dot(z, w1s_ref[i], preferred_element_type=f32) + b1s_ref[i]
        h1 = jnp.maximum(h1, 0.0)
        h2 = jnp.dot(h1, w2s_ref[i], preferred_element_type=f32) + b2s_ref[i]
        h = jnp.maximum(h2, 0.0)         # dropout = identity (inference)

    # --- global_add_pool (contract node axis) + fc_out, fused --------------
    pooled = lax.dot_general(pool_ref[...].astype(f32), h,
                             (((0,), (0,)), ((), ())),
                             preferred_element_type=f32)                  # [G, H]
    pooled_ref[...] = pooled
    logits_ref[...] = (jnp.dot(pooled, fcw_ref[...], preferred_element_type=f32)
                       + fcb_ref[...])


# ---------------------------------------------------------------------------
# parameter construction (PyTorch Linear-style init) and packing
# ---------------------------------------------------------------------------
def _init_linear(key, fan_in, fan_out):
    k1, k2 = jax.random.split(key)
    bound = 1.0 / float(fan_in) ** 0.5
    w = jax.random.uniform(k1, (fan_in, fan_out), jnp.float32, -bound, bound)
    b = jax.random.uniform(k2, (1, fan_out), jnp.float32, -bound, bound)
    return w, b


def init_params(key, x_dim, edge_attr_dim, hidden, n_layers, out_dim):
    keys = jax.random.split(key, 3 + 2 * n_layers)
    node_w, node_b = _init_linear(keys[0], x_dim, hidden)
    edge_w, edge_b = _init_linear(keys[1], edge_attr_dim, hidden)
    fc_w, fc_b = _init_linear(keys[2], hidden, out_dim)
    layers = []
    for i in range(n_layers):
        w1, b1 = _init_linear(keys[3 + 2 * i], hidden, hidden)
        w2, b2 = _init_linear(keys[4 + 2 * i], hidden, hidden)
        layers.append(dict(
            w1=w1, b1=b1, w2=w2, b2=b2,
            # BatchNorm1d running stats / affine (eval mode)
            gamma=jnp.ones((1, hidden), jnp.float32),
            beta=jnp.zeros((1, hidden), jnp.float32),
            mean=jnp.zeros((1, hidden), jnp.float32),
            var=jnp.ones((1, hidden), jnp.float32),
        ))
    return dict(node_w=node_w, node_b=node_b, edge_w=edge_w, edge_b=edge_b,
                fc_w=fc_w, fc_b=fc_b, layers=layers)


def pack_params(params):
    """Fold eval BatchNorm into Linear1, zero-pad to lane-dense shapes, stack layers."""
    x_dim, hidden = params["node_w"].shape
    edge_dim = params["edge_w"].shape[0]
    out_dim = params["fc_w"].shape[1]
    HP = _round_up(hidden, 128)
    FP = _round_up(x_dim, 128)
    FEP = _round_up(edge_dim, 128)
    OP = _round_up(out_dim, 128)

    packed = dict(
        node_w=_pad2(params["node_w"], FP, HP),
        node_b=_pad2(params["node_b"], 1, HP),
        edge_w=_pad2(params["edge_w"], FEP, HP),
        edge_b=_pad2(params["edge_b"], 1, HP),
        fc_w=_pad2(params["fc_w"], HP, OP),
        fc_b=_pad2(params["fc_b"], 1, OP),
    )
    w1s, b1s, w2s, b2s = [], [], [], []
    for lp in params["layers"]:
        scale = lp["gamma"] * lax.rsqrt(lp["var"] + 1e-5)                  # [1, hidden]
        w1f = lp["w1"] * scale                                             # scale output cols
        b1f = (lp["b1"] - lp["mean"]) * scale + lp["beta"]
        w1s.append(_pad2(w1f, HP, HP))
        b1s.append(_pad2(b1f, 1, HP))
        w2s.append(_pad2(lp["w2"], HP, HP))
        b2s.append(_pad2(lp["b2"], 1, HP))
    packed["w1s"] = jnp.stack(w1s)      # [L, HP, HP]
    packed["b1s"] = jnp.stack(b1s)      # [L, 1, HP]
    packed["w2s"] = jnp.stack(w2s)
    packed["b2s"] = jnp.stack(b2s)
    return packed


# ---------------------------------------------------------------------------
# forward (inference), mirrors GIN_with_fc_extractor.forward
# ---------------------------------------------------------------------------
@functools.partial(jax.jit, static_argnames=("n_graphs", "hidden", "out_dim"))
def forward(packed, x, edge_index, batch, edge_attr, edge_atten=None, *,
            n_graphs, hidden, out_dim):
    f32 = jnp.float32
    n_nodes, x_dim = x.shape
    n_edges = edge_index.shape[1]
    edge_dim = edge_attr.shape[1]

    FP = packed["node_w"].shape[0]
    FEP = packed["edge_w"].shape[0]
    HP = packed["node_w"].shape[1]
    OP = packed["fc_w"].shape[1]
    NP = _round_up(n_nodes, 128)        # lane-dense one-hot operators
    EP = _round_up(n_edges, 8)
    GP = _round_up(n_graphs, 8)

    # --- cheap XLA glue: zero-pad inputs, build bf16 one-hot operators -----
    x_p = jnp.pad(x.astype(f32), ((0, NP - n_nodes), (0, FP - x_dim)))
    ea_p = jnp.pad(edge_attr.astype(f32), ((0, EP - n_edges), (0, FEP - edge_dim)))
    if edge_atten is None:
        att = jnp.ones((n_edges, 1), f32)
    else:
        att = edge_atten.reshape(n_edges, 1).astype(f32)
    att = jnp.pad(att, ((0, EP - n_edges), (0, 0)))                       # padded edges -> 0

    # out-of-range pad index -> all-zero one-hot row (padded rows contribute nothing)
    src = jnp.pad(edge_index[0], (0, EP - n_edges), constant_values=NP)
    dst = jnp.pad(edge_index[1], (0, EP - n_edges), constant_values=NP)
    bat = jnp.pad(batch, (0, NP - n_nodes), constant_values=GP)
    a_src = jax.nn.one_hot(src, NP, dtype=jnp.bfloat16)                   # [E, N]
    a_dst = jax.nn.one_hot(dst, NP, dtype=jnp.bfloat16)                   # [E, N]
    pool = jax.nn.one_hot(bat, GP, dtype=jnp.bfloat16)                    # [N, G]

    args = (x_p, ea_p, att, a_src, a_dst, pool,
            packed["node_w"], packed["node_b"], packed["edge_w"], packed["edge_b"],
            packed["w1s"], packed["b1s"], packed["w2s"], packed["b2s"],
            packed["fc_w"], packed["fc_b"])

    logits_p, pooled_p = pl.pallas_call(
        _gin_forward_kernel,
        out_shape=(jax.ShapeDtypeStruct((GP, OP), f32),
                   jax.ShapeDtypeStruct((GP, HP), f32)),
        in_specs=[_full_spec(a.shape) for a in args],
        out_specs=(_full_spec((GP, OP)), _full_spec((GP, HP))),
    )(*args)

    return logits_p[:n_graphs, :out_dim], pooled_p[:n_graphs, :hidden]


# ---------------------------------------------------------------------------
# pure-JAX reference (true gather / segment_sum scatter) for a sanity check
# ---------------------------------------------------------------------------
def reference_forward(params, x, edge_index, batch, edge_attr, edge_atten, n_graphs):
    h = x @ params["node_w"] + params["node_b"]
    ea = edge_attr @ params["edge_w"] + params["edge_b"]
    src, dst = edge_index[0], edge_index[1]
    if edge_atten is None:
        att = jnp.ones((edge_index.shape[1], 1), jnp.float32)
    else:
        att = edge_atten.reshape(-1, 1).astype(jnp.float32)
    for lp in params["layers"]:
        msg = jnp.maximum(h[src] + ea, 0.0) * att
        aggr = jax.ops.segment_sum(msg, dst, num_segments=h.shape[0])
        z = aggr + h
        h1 = z @ lp["w1"] + lp["b1"]
        h1 = (h1 - lp["mean"]) * lax.rsqrt(lp["var"] + 1e-5) * lp["gamma"] + lp["beta"]
        h1 = jnp.maximum(h1, 0.0)
        h2 = h1 @ lp["w2"] + lp["b2"]
        h = jnp.maximum(h2, 0.0)
    pooled = jax.ops.segment_sum(h, batch, num_segments=n_graphs)
    logits = pooled @ params["fc_w"] + params["fc_b"]
    return logits, pooled


# ---------------------------------------------------------------------------
if __name__ == "__main__":
    # Model config: hidden_size=64, n_layers=2, num_class=2, multi_label=False
    X_DIM, EDGE_DIM, HIDDEN, N_LAYERS = 16, 8, 64, 2
    OUT_DIM = 1                      # num_class == 2 and not multi_label
    N_PER_GRAPH, N_GRAPHS = 8, 3
    N_NODES = N_PER_GRAPH * N_GRAPHS
    E_PER_GRAPH = 16
    N_EDGES = E_PER_GRAPH * N_GRAPHS

    key = jax.random.PRNGKey(0)
    k_param, k_x, k_ea, *k_edges = jax.random.split(key, 3 + 2 * N_GRAPHS)

    params = init_params(k_param, X_DIM, EDGE_DIM, HIDDEN, N_LAYERS, OUT_DIM)
    packed = pack_params(params)     # fold BN, pad to 128 lanes, stack layers (once)

    x = jax.random.normal(k_x, (N_NODES, X_DIM), jnp.float32)
    edge_attr = jax.random.normal(k_ea, (N_EDGES, EDGE_DIM), jnp.float32)

    # deterministic edges kept within each graph
    srcs, dsts = [], []
    for g in range(N_GRAPHS):
        lo, hi = g * N_PER_GRAPH, (g + 1) * N_PER_GRAPH
        srcs.append(jax.random.randint(k_edges[2 * g], (E_PER_GRAPH,), lo, hi))
        dsts.append(jax.random.randint(k_edges[2 * g + 1], (E_PER_GRAPH,), lo, hi))
    edge_index = jnp.stack([jnp.concatenate(srcs), jnp.concatenate(dsts)])  # [2, E]
    batch = jnp.repeat(jnp.arange(N_GRAPHS, dtype=jnp.int32), N_PER_GRAPH)  # [N]

    logits, pooled = forward(packed, x, edge_index, batch, edge_attr,
                             n_graphs=N_GRAPHS, hidden=HIDDEN, out_dim=OUT_DIM)
    jax.block_until_ready((logits, pooled))
    assert logits.shape == (N_GRAPHS, OUT_DIM)
    assert pooled.shape == (N_GRAPHS, HIDDEN)

    # sanity check against the pure-JAX reference (loose tol: MXU f32 matmul rounding)
    ref_logits, ref_pooled = reference_forward(params, x, edge_index, batch,
                                               edge_attr, None, N_GRAPHS)
    assert jnp.allclose(logits, ref_logits, rtol=2e-2, atol=2e-2)
    assert jnp.allclose(pooled, ref_pooled, rtol=2e-2, atol=2e-2)

    print("KERNEL_OK")
</pallas_src>

<mosaic_0001>
module attributes {stable_mosaic.version = 11 : i64} {
  func.func @_gin_forward_kernel(%arg0: memref<128x128xf32, #tpu.memory_space<vmem>>, %arg1: memref<48x128xf32, #tpu.memory_space<vmem>>, %arg2: memref<48x1xf32, #tpu.memory_space<vmem>>, %arg3: memref<48x128xbf16, #tpu.memory_space<vmem>>, %arg4: memref<48x128xbf16, #tpu.memory_space<vmem>>, %arg5: memref<128x8xbf16, #tpu.memory_space<vmem>>, %arg6: memref<128x128xf32, #tpu.memory_space<vmem>>, %arg7: memref<1x128xf32, #tpu.memory_space<vmem>>, %arg8: memref<128x128xf32, #tpu.memory_space<vmem>>, %arg9: memref<1x128xf32, #tpu.memory_space<vmem>>, %arg10: memref<2x128x128xf32, #tpu.memory_space<vmem>>, %arg11: memref<2x1x128xf32, #tpu.memory_space<vmem>>, %arg12: memref<2x128x128xf32, #tpu.memory_space<vmem>>, %arg13: memref<2x1x128xf32, #tpu.memory_space<vmem>>, %arg14: memref<128x128xf32, #tpu.memory_space<vmem>>, %arg15: memref<1x128xf32, #tpu.memory_space<vmem>>, %arg16: memref<8x128xf32, #tpu.memory_space<vmem>>, %arg17: memref<8x128xf32, #tpu.memory_space<vmem>>) attributes {dimension_semantics = [], scalar_prefetch = 0 : i64, scratch_operands = 0 : i64, tpu.core_type = #tpu.core_type<tc>} {
    %c0 = arith.constant 0 : index
    %c0_0 = arith.constant 0 : index
    %0 = vector.load %arg0[%c0, %c0_0] : memref<128x128xf32, #tpu.memory_space<vmem>>, vector<128x128xf32>
    %c0_1 = arith.constant 0 : index
    %c0_2 = arith.constant 0 : index
    %1 = vector.load %arg6[%c0_1, %c0_2] : memref<128x128xf32, #tpu.memory_space<vmem>>, vector<128x128xf32>
    %cst = arith.constant dense<0.000000e+00> : vector<128x128xf32>
    %2 = tpu.matmul %0, %1, %cst {dimension_numbers = #tpu.dot_dimension_numbers<[1], [0], [0], [1], [0, 0, 1, 1], [], []>} : vector<128x128xf32>, vector<128x128xf32>, vector<128x128xf32> -> vector<128x128xf32>
    %c0_3 = arith.constant 0 : index
    %c0_4 = arith.constant 0 : index
    %3 = vector.load %arg7[%c0_3, %c0_4] : memref<1x128xf32, #tpu.memory_space<vmem>>, vector<1x128xf32>
    %4 = vector.broadcast %3 : vector<1x128xf32> to vector<128x128xf32>
    %5 = arith.addf %2, %4 : vector<128x128xf32>
    %c0_5 = arith.constant 0 : index
    %c0_6 = arith.constant 0 : index
    %6 = vector.load %arg1[%c0_5, %c0_6] : memref<48x128xf32, #tpu.memory_space<vmem>>, vector<48x128xf32>
    %c0_7 = arith.constant 0 : index
    %c0_8 = arith.constant 0 : index
    %7 = vector.load %arg8[%c0_7, %c0_8] : memref<128x128xf32, #tpu.memory_space<vmem>>, vector<128x128xf32>
    %cst_9 = arith.constant dense<0.000000e+00> : vector<48x128xf32>
    %8 = tpu.matmul %6, %7, %cst_9 {dimension_numbers = #tpu.dot_dimension_numbers<[1], [0], [0], [1], [0, 0, 1, 1], [], []>} : vector<48x128xf32>, vector<128x128xf32>, vector<48x128xf32> -> vector<48x128xf32>
    %c0_10 = arith.constant 0 : index
    %c0_11 = arith.constant 0 : index
    %9 = vector.load %arg9[%c0_10, %c0_11] : memref<1x128xf32, #tpu.memory_space<vmem>>, vector<1x128xf32>
    %10 = vector.broadcast %9 : vector<1x128xf32> to vector<48x128xf32>
    %11 = arith.addf %8, %10 : vector<48x128xf32>
    %c0_12 = arith.constant 0 : index
    %c0_13 = arith.constant 0 : index
    %12 = vector.load %arg3[%c0_12, %c0_13] : memref<48x128xbf16, #tpu.memory_space<vmem>>, vector<48x128xbf16>
    %13 = arith.extf %12 : vector<48x128xbf16> to vector<48x128xf32>
    %c0_14 = arith.constant 0 : index
    %c0_15 = arith.constant 0 : index
    %14 = vector.load %arg4[%c0_14, %c0_15] : memref<48x128xbf16, #tpu.memory_space<vmem>>, vector<48x128xbf16>
    %15 = arith.extf %14 : vector<48x128xbf16> to vector<48x128xf32>
    %c0_16 = arith.constant 0 : index
    %c0_17 = arith.constant 0 : index
    %16 = vector.load %arg2[%c0_16, %c0_17] : memref<48x1xf32, #tpu.memory_space<vmem>>, vector<48x1xf32>
    %cst_18 = arith.constant dense<0.000000e+00> : vector<48x128xf32>
    %17 = tpu.matmul %13, %5, %cst_18 {dimension_numbers = #tpu.dot_dimension_numbers<[1], [0], [0], [1], [0, 0, 1, 1], [], []>} : vector<48x128xf32>, vector<128x128xf32>, vector<48x128xf32> -> vector<48x128xf32>
    %18 = arith.addf %17, %11 : vector<48x128xf32>
    %cst_19 = arith.constant 0.000000e+00 : f32
    %19 = vector.broadcast %cst_19 : f32 to vector<48x128xf32>
    %20 = arith.maximumf %18, %19 : vector<48x128xf32>
    %21 = vector.broadcast %16 : vector<48x1xf32> to vector<48x128xf32>
    %22 = arith.mulf %20, %21 : vector<48x128xf32>
    %cst_20 = arith.constant dense<0.000000e+00> : vector<128x128xf32>
    %23 = tpu.matmul %15, %22, %cst_20 {dimension_numbers = #tpu.dot_dimension_numbers<[0], [0], [1], [1], [0, 1, 1, 1], [], []>} : vector<48x128xf32>, vector<48x128xf32>, vector<128x128xf32> -> vector<128x128xf32>
    %24 = arith.addf %23, %5 : vector<128x128xf32>
    %c0_21 = arith.constant 0 : index
    %c0_22 = arith.constant 0 : index
    %c0_23 = arith.constant 0 : index
    %25 = vector.load %arg10[%c0_21, %c0_22, %c0_23] : memref<2x128x128xf32, #tpu.memory_space<vmem>>, vector<1x128x128xf32>
    %26 = vector.shape_cast %25 : vector<1x128x128xf32> to vector<128x128xf32>
    %cst_24 = arith.constant dense<0.000000e+00> : vector<128x128xf32>
    %27 = tpu.matmul %24, %26, %cst_24 {dimension_numbers = #tpu.dot_dimension_numbers<[1], [0], [0], [1], [0, 0, 1, 1], [], []>} : vector<128x128xf32>, vector<128x128xf32>, vector<128x128xf32> -> vector<128x128xf32>
    %c0_25 = arith.constant 0 : index
    %c0_26 = arith.constant 0 : index
    %c0_27 = arith.constant 0 : index
    %28 = vector.load %arg11[%c0_25, %c0_26, %c0_27] : memref<2x1x128xf32, #tpu.memory_space<vmem>>, vector<1x1x128xf32>
    %29 = vector.shape_cast %28 : vector<1x1x128xf32> to vector<1x128xf32>
    %30 = vector.broadcast %29 : vector<1x128xf32> to vector<128x128xf32>
    %31 = arith.addf %27, %30 : vector<128x128xf32>
    %cst_28 = arith.constant 0.000000e+00 : f32
    %32 = vector.broadcast %cst_28 : f32 to vector<128x128xf32>
    %33 = arith.maximumf %31, %32 : vector<128x128xf32>
    %c0_29 = arith.constant 0 : index
    %c0_30 = arith.constant 0 : index
    %c0_31 = arith.constant 0 : index
    %34 = vector.load %arg12[%c0_29, %c0_30, %c0_31] : memref<2x128x128xf32, #tpu.memory_space<vmem>>, vector<1x128x128xf32>
    %35 = vector.shape_cast %34 : vector<1x128x128xf32> to vector<128x128xf32>
    %cst_32 = arith.constant dense<0.000000e+00> : vector<128x128xf32>
    %36 = tpu.matmul %33, %35, %cst_32 {dimension_numbers = #tpu.dot_dimension_numbers<[1], [0], [0], [1], [0, 0, 1, 1], [], []>} : vector<128x128xf32>, vector<128x128xf32>, vector<128x128xf32> -> vector<128x128xf32>
    %c0_33 = arith.constant 0 : index
    %c0_34 = arith.constant 0 : index
    %c0_35 = arith.constant 0 : index
    %37 = vector.load %arg13[%c0_33, %c0_34, %c0_35] : memref<2x1x128xf32, #tpu.memory_space<vmem>>, vector<1x1x128xf32>
    %38 = vector.shape_cast %37 : vector<1x1x128xf32> to vector<1x128xf32>
    %39 = vector.broadcast %38 : vector<1x128xf32> to vector<128x128xf32>
    %40 = arith.addf %36, %39 : vector<128x128xf32>
    %cst_36 = arith.constant 0.000000e+00 : f32
    %41 = vector.broadcast %cst_36 : f32 to vector<128x128xf32>
    %42 = arith.maximumf %40, %41 : vector<128x128xf32>
    %cst_37 = arith.constant dense<0.000000e+00> : vector<48x128xf32>
    %43 = tpu.matmul %13, %42, %cst_37 {dimension_numbers = #tpu.dot_dimension_numbers<[1], [0], [0], [1], [0, 0, 1, 1], [], []>} : vector<48x128xf32>, vector<128x128xf32>, vector<48x128xf32> -> vector<48x128xf32>
    %44 = arith.addf %43, %11 : vector<48x128xf32>
    %cst_38 = arith.constant 0.000000e+00 : f32
    %45 = vector.broadcast %cst_38 : f32 to vector<48x128xf32>
    %46 = arith.maximumf %44, %45 : vector<48x128xf32>
    %47 = vector.broadcast %16 : vector<48x1xf32> to vector<48x128xf32>
    %48 = arith.mulf %46, %47 : vector<48x128xf32>
    %cst_39 = arith.constant dense<0.000000e+00> : vector<128x128xf32>
    %49 = tpu.matmul %15, %48, %cst_39 {dimension_numbers = #tpu.dot_dimension_numbers<[0], [0], [1], [1], [0, 1, 1, 1], [], []>} : vector<48x128xf32>, vector<48x128xf32>, vector<128x128xf32> -> vector<128x128xf32>
    %50 = arith.addf %49, %42 : vector<128x128xf32>
    %c1 = arith.constant 1 : index
    %c0_40 = arith.constant 0 : index
    %c0_41 = arith.constant 0 : index
    %51 = vector.load %arg10[%c1, %c0_40, %c0_41] : memref<2x128x128xf32, #tpu.memory_space<vmem>>, vector<1x128x128xf32>
    %52 = vector.shape_cast %51 : vector<1x128x128xf32> to vector<128x128xf32>
    %cst_42 = arith.constant dense<0.000000e+00> : vector<128x128xf32>
    %53 = tpu.matmul %50, %52, %cst_42 {dimension_numbers = #tpu.dot_dimension_numbers<[1], [0], [0], [1], [0, 0, 1, 1], [], []>} : vector<128x128xf32>, vector<128x128xf32>, vector<128x128xf32> -> vector<128x128xf32>
    %c1_43 = arith.constant 1 : index
    %c0_44 = arith.constant 0 : index
    %c0_45 = arith.constant 0 : index
    %54 = vector.load %arg11[%c1_43, %c0_44, %c0_45] : memref<2x1x128xf32, #tpu.memory_space<vmem>>, vector<1x1x128xf32>
    %55 = vector.shape_cast %54 : vector<1x1x128xf32> to vector<1x128xf32>
    %56 = vector.broadcast %55 : vector<1x128xf32> to vector<128x128xf32>
    %57 = arith.addf %53, %56 : vector<128x128xf32>
    %cst_46 = arith.constant 0.000000e+00 : f32
    %58 = vector.broadcast %cst_46 : f32 to vector<128x128xf32>
    %59 = arith.maximumf %57, %58 : vector<128x128xf32>
    %c1_47 = arith.constant 1 : index
    %c0_48 = arith.constant 0 : index
    %c0_49 = arith.constant 0 : index
    %60 = vector.load %arg12[%c1_47, %c0_48, %c0_49] : memref<2x128x128xf32, #tpu.memory_space<vmem>>, vector<1x128x128xf32>
    %61 = vector.shape_cast %60 : vector<1x128x128xf32> to vector<128x128xf32>
    %cst_50 = arith.constant dense<0.000000e+00> : vector<128x128xf32>
    %62 = tpu.matmul %59, %61, %cst_50 {dimension_numbers = #tpu.dot_dimension_numbers<[1], [0], [0], [1], [0, 0, 1, 1], [], []>} : vector<128x128xf32>, vector<128x128xf32>, vector<128x128xf32> -> vector<128x128xf32>
    %c1_51 = arith.constant 1 : index
    %c0_52 = arith.constant 0 : index
    %c0_53 = arith.constant 0 : index
    %63 = vector.load %arg13[%c1_51, %c0_52, %c0_53] : memref<2x1x128xf32, #tpu.memory_space<vmem>>, vector<1x1x128xf32>
    %64 = vector.shape_cast %63 : vector<1x1x128xf32> to vector<1x128xf32>
    %65 = vector.broadcast %64 : vector<1x128xf32> to vector<128x128xf32>
    %66 = arith.addf %62, %65 : vector<128x128xf32>
    %cst_54 = arith.constant 0.000000e+00 : f32
    %67 = vector.broadcast %cst_54 : f32 to vector<128x128xf32>
    %68 = arith.maximumf %66, %67 : vector<128x128xf32>
    %c0_55 = arith.constant 0 : index
    %c0_56 = arith.constant 0 : index
    %69 = vector.load %arg5[%c0_55, %c0_56] : memref<128x8xbf16, #tpu.memory_space<vmem>>, vector<128x8xbf16>
    %70 = arith.extf %69 : vector<128x8xbf16> to vector<128x8xf32>
    %cst_57 = arith.constant dense<0.000000e+00> : vector<8x128xf32>
    %71 = tpu.matmul %70, %68, %cst_57 {dimension_numbers = #tpu.dot_dimension_numbers<[0], [0], [1], [1], [0, 1, 1, 1], [], []>} : vector<128x8xf32>, vector<128x128xf32>, vector<8x128xf32> -> vector<8x128xf32>
    %c0_58 = arith.constant 0 : index
    %c0_59 = arith.constant 0 : index
    %72 = vector.load %arg17[%c0_58, %c0_59] : memref<8x128xf32, #tpu.memory_space<vmem>>, vector<8x128xf32>
    tpu.vector_store %arg17[%c0_58, %c0_59], %71 {strides = array<i32>} : memref<8x128xf32, #tpu.memory_space<vmem>>, vector<8x128xf32>,
    %c0_60 = arith.constant 0 : index
    %c0_61 = arith.constant 0 : index
    %73 = vector.load %arg14[%c0_60, %c0_61] : memref<128x128xf32, #tpu.memory_space<vmem>>, vector<128x128xf32>
    %cst_62 = arith.constant dense<0.000000e+00> : vector<8x128xf32>
    %74 = tpu.matmul %71, %73, %cst_62 {dimension_numbers = #tpu.dot_dimension_numbers<[1], [0], [0], [1], [0, 0, 1, 1], [], []>} : vector<8x128xf32>, vector<128x128xf32>, vector<8x128xf32> -> vector<8x128xf32>
    %c0_63 = arith.constant 0 : index
    %c0_64 = arith.constant 0 : index
    %75 = vector.load %arg15[%c0_63, %c0_64] : memref<1x128xf32, #tpu.memory_space<vmem>>, vector<1x128xf32>
    %76 = vector.broadcast %75 : vector<1x128xf32> to vector<8x128xf32>
    %77 = arith.addf %74, %76 : vector<8x128xf32>
    %c0_65 = arith.constant 0 : index
    %c0_66 = arith.constant 0 : index
    %78 = vector.load %arg16[%c0_65, %c0_66] : memref<8x128xf32, #tpu.memory_space<vmem>>, vector<8x128xf32>
    tpu.vector_store %arg16[%c0_65, %c0_66], %77 {strides = array<i32>} : memref<8x128xf32, #tpu.memory_space<vmem>>, vector<8x128xf32>,
    return
  }
}

</mosaic_0001>

<llo_original>
// kernel: forward.1
$region0: #{forward.1}
  #allocation0 [shape = 'u32[]', space=smem, size = 0x4, offset = 0x4, fixed_abs, tag = 'smem constant byte address 0x4 - core index']
  #allocation1 [shape = 'u32[72,128]{1,0:T(1,128)}', space=vmem, size = 0x9000, scoped, tag = 'internal scratch']
  %s0 = inlined_call_operand.vmem [shape: f32[128,128], index: 0, kind: input, shape index: {}]
  %s1 = inlined_call_operand.vmem [shape: f32[48,128], index: 1, kind: input, shape index: {}]
  %s2 = inlined_call_operand.vmem [shape: f32[48,1], index: 2, kind: input, shape index: {}]
  %s3 = inlined_call_operand.vmem [shape: bf16[48,128], index: 3, kind: input, shape index: {}]
  %s4 = inlined_call_operand.vmem [shape: bf16[48,128], index: 4, kind: input, shape index: {}]
  %s5 = inlined_call_operand.vmem [shape: bf16[128,8], index: 5, kind: input, shape index: {}]
  %s6 = inlined_call_operand.vmem [shape: f32[128,128], index: 6, kind: input, shape index: {}]
  %s7 = inlined_call_operand.vmem [shape: f32[1,128], index: 7, kind: input, shape index: {}]
  %s8 = inlined_call_operand.hbm [shape: f32[128,128], index: 8, kind: input, shape index: {}]
  %s9 = inlined_call_operand.vmem [shape: f32[1,128], index: 9, kind: input, shape index: {}]
  %s10 = inlined_call_operand.vmem [shape: f32[2,128,128], index: 10, kind: input, shape index: {}]
  %s11 = inlined_call_operand.vmem [shape: f32[2,1,128], index: 11, kind: input, shape index: {}]
  %s12 = inlined_call_operand.hbm [shape: f32[2,128,128], index: 12, kind: input, shape index: {}]
  %s13 = inlined_call_operand.vmem [shape: f32[2,1,128], index: 13, kind: input, shape index: {}]
  %s14 = inlined_call_operand.hbm [shape: f32[128,128], index: 14, kind: input, shape index: {}]
  %s15 = inlined_call_operand.vmem [shape: f32[1,128], index: 15, kind: input, shape index: {}]
  %s16 = inlined_call_operand.vmem [shape: f32[8,128], index: 16, kind: output, shape index: {0}]
  %s17 = inlined_call_operand.vmem [shape: f32[8,128], index: 17, kind: output, shape index: {1}]
  %18 = xla_tuple %s16, %s17
  %s19 = sld [smem:[#allocation0]]
  $region94: #{forward.1} parent=0
    _
  %s21 = ssub.s32 1, %s19
  %s22 = scalar_select 0, %s21, %s19
  $region1: #{forward.1} parent=0
    #allocation2 [shape = 'u8[65536]{0}', space=vmem, size = 0x10000, scoped, tag = 'input window, operand 8, single buffered']
    #allocation3 [shape = 's32[1]{0}', space=sflag, size = 0x4, scoped, tag = 'scoped memory for forward.1']
    #allocation4 [shape = 'u8[131072]{0}', space=vmem, size = 0x20000, scoped, tag = 'input window, operand 12, single buffered']
    #allocation5 [shape = 's32[1]{0}', space=sflag, size = 0x4, scoped, tag = 'scoped memory for forward.1']
    #allocation6 [shape = 'u8[65536]{0}', space=vmem, size = 0x10000, scoped, tag = 'input window, operand 14, single buffered']
    %23 = vsyncpa [#allocation3], 0
    %24 = vsyncpa [#allocation5], 0
    // Predicated region
    $region2: #{forward.1} parent=1 // pred_check
      _
    $region3: #{forward.1} parent=1 // pred_check_branch
      %26 = sbr.rel (0) target = $region5
    $region4: #{forward.1} parent=1 // pred_region
      _
    $region5: #{forward.1} parent=1 // pred_fallthru
      _
    // Predicated region
    $region6: #{forward.1} parent=1 // pred_check
      _
    $region7: #{forward.1} parent=1 // pred_check_branch
      %28 = sbr.rel (0) target = $region9
    $region8: #{forward.1} parent=1 // pred_region
      _
    $region9: #{forward.1} parent=1 // pred_fallthru
      _
    // Predicated region
    $region10: #{forward.1} parent=1 // pred_check
      _
    $region11: #{forward.1} parent=1 // pred_check_branch
      %30 = sbr.rel (0) target = $region13
    $region12: #{forward.1} parent=1 // pred_region
      _
    $region13: #{forward.1} parent=1 // pred_fallthru
      _
    // Predicated region
    $region14: #{forward.1} parent=1 // pred_check
      _
    $region15: #{forward.1} parent=1 // pred_check_branch
      %32 = sbr.rel (0) target = $region17
    $region16: #{forward.1} parent=1 // pred_region
      _
    $region17: #{forward.1} parent=1 // pred_fallthru
      _
    // Predicated region
    $region18: #{forward.1} parent=1 // pred_check
      _
    $region19: #{forward.1} parent=1 // pred_check_branch
      %34 = sbr.rel (0) target = $region21
    $region20: #{forward.1} parent=1 // pred_region
      _
    $region21: #{forward.1} parent=1 // pred_fallthru
      _
    // Predicated region
    $region22: #{forward.1} parent=1 // pred_check
      _
    $region23: #{forward.1} parent=1 // pred_check_branch
      %36 = sbr.rel (0) target = $region25
    $region24: #{forward.1} parent=1 // pred_region
      _
    $region25: #{forward.1} parent=1 // pred_fallthru
      _
    // Predicated region
    $region26: #{forward.1} parent=1 // pred_check
      _
    $region27: #{forward.1} parent=1 // pred_check_branch
      %38 = sbr.rel (0) target = $region29
    $region28: #{forward.1} parent=1 // pred_region
      _
    $region29: #{forward.1} parent=1 // pred_fallthru
      _
    // Predicated region
    $region30: #{forward.1} parent=1 // pred_check
      _
    $region31: #{forward.1} parent=1 // pred_check_branch
      %40 = sbr.rel (0) target = $region33
    $region32: #{forward.1} parent=1 // pred_region
      _
    $region33: #{forward.1} parent=1 // pred_fallthru
      _
    // Predicated region
    $region34: #{forward.1} parent=1 // pred_check
      _
    $region35: #{forward.1} parent=1 // pred_check_branch
      %42 = sbr.rel (0) target = $region37
    $region36: #{forward.1} parent=1 // pred_region
      %44 = vsyncadd [#allocation3], 0
      %s45 = sshll.u32 %s8, 4
      %s46 = int_to_ptr.hbm [resolvable:$true] %s45
      %s47 = sshll.u32 [#allocation2], 4
      %s48 = int_to_ptr.vmem [resolvable:$true] %s47
      %53 = dma.hbm_to_vmem [thread:$0]  %s46, 2048, %s48, [#allocation3], 128, 128, 8
    $region37: #{forward.1} parent=1 // pred_fallthru
      _
    // Predicated region
    $region38: #{forward.1} parent=1 // pred_check
      _
    $region39: #{forward.1} parent=1 // pred_check_branch
      %55 = sbr.rel (0) target = $region41
    $region40: #{forward.1} parent=1 // pred_region
      _
    $region41: #{forward.1} parent=1 // pred_fallthru
      _
    // Predicated region
    $region42: #{forward.1} parent=1 // pred_check
      _
    $region43: #{forward.1} parent=1 // pred_check_branch
      %57 = sbr.rel (0) target = $region45
    $region44: #{forward.1} parent=1 // pred_region
      _
    $region45: #{forward.1} parent=1 // pred_fallthru
      _
    // Predicated region
    $region46: #{forward.1} parent=1 // pred_check
      _
    $region47: #{forward.1} parent=1 // pred_check_branch
      %59 = sbr.rel (0) target = $region49
    $region48: #{forward.1} parent=1 // pred_region
      _
    $region49: #{forward.1} parent=1 // pred_fallthru
      _
    // Predicated region
    $region50: #{forward.1} parent=1 // pred_check
      _
    $region51: #{forward.1} parent=1 // pred_check_branch
      %61 = sbr.rel (0) target = $region53
    $region52: #{forward.1} parent=1 // pred_region
      %63 = vsyncadd [#allocation5], 0
      %s64 = sshll.u32 %s12, 4
      %s65 = int_to_ptr.hbm [resolvable:$true] %s64
      %s66 = sshll.u32 [#allocation4], 4
      %s67 = int_to_ptr.vmem [resolvable:$true] %s66
      %72 = dma.hbm_to_vmem [thread:$0]  %s65, 4096, %s67, [#allocation5], 128, 128, 8
    $region53: #{forward.1} parent=1 // pred_fallthru
      _
    // Predicated region
    $region54: #{forward.1} parent=1 // pred_check
      _
    $region55: #{forward.1} parent=1 // pred_check_branch
      %74 = sbr.rel (0) target = $region57
    $region56: #{forward.1} parent=1 // pred_region
      _
    $region57: #{forward.1} parent=1 // pred_fallthru
      _
    // Predicated region
    $region58: #{forward.1} parent=1 // pred_check
      _
    $region59: #{forward.1} parent=1 // pred_check_branch
      %76 = sbr.rel (0) target = $region61
    $region60: #{forward.1} parent=1 // pred_region
      %78 = vsyncadd [#allocation5], 0
      %s79 = sshll.u32 %s14, 4
      %s80 = int_to_ptr.hbm [resolvable:$true] %s79
      %s81 = sshll.u32 [#allocation6], 4
      %s82 = int_to_ptr.vmem [resolvable:$true] %s81
      %87 = dma.hbm_to_vmem [thread:$0]  %s80, 2048, %s82, [#allocation5], 128, 128, 8
    $region61: #{forward.1} parent=1 // pred_fallthru
      _
    // Predicated region
    $region62: #{forward.1} parent=1 // pred_check
      _
    $region63: #{forward.1} parent=1 // pred_check_branch
      %89 = sbr.rel (0) target = $region65
    $region64: #{forward.1} parent=1 // pred_region
      _
    $region65: #{forward.1} parent=1 // pred_fallthru
      _
    // Predicated region
    $region66: #{forward.1} parent=1 // pred_check
      _
    $region67: #{forward.1} parent=1 // pred_check_branch
      %91 = sbr.rel (0) target = $region69
    $region68: #{forward.1} parent=1 // pred_region
      %93 = dma.done [#allocation3], 2048
    $region69: #{forward.1} parent=1 // pred_fallthru
      _
    // Predicated region
    $region70: #{forward.1} parent=1 // pred_check
      _
    $region71: #{forward.1} parent=1 // pred_check_branch
      %95 = sbr.rel (0) target = $region73
    $region72: #{forward.1} parent=1 // pred_region
      %97 = dma.done [#allocation5], 4096
    $region73: #{forward.1} parent=1 // pred_fallthru
      _
    // Predicated region
    $region74: #{forward.1} parent=1 // pred_check
      _
    $region75: #{forward.1} parent=1 // pred_check_branch
      %99 = sbr.rel (0) target = $region77
    $region76: #{forward.1} parent=1 // pred_region
      %101 = dma.done [#allocation5], 2048
    $region77: #{forward.1} parent=1 // pred_fallthru
      _
    %v102 = vld [vmem:[%s0] sm:$0xff]
    %v103 = vld [vmem:[%s0 + $0x8] sm:$0xff]
    %v104 = vld [vmem:[%s0 + $0x10] sm:$0xff]
    %v105 = vld [vmem:[%s0 + $0x18] sm:$0xff]
    %v106 = vld [vmem:[%s0 + $0x20] sm:$0xff]
    %v107 = vld [vmem:[%s0 + $0x28] sm:$0xff]
    %v108 = vld [vmem:[%s0 + $0x30] sm:$0xff]
    %v109 = vld [vmem:[%s0 + $0x38] sm:$0xff]
    %v110 = vld [vmem:[%s0 + $0x40] sm:$0xff]
    %v111 = vld [vmem:[%s0 + $0x48] sm:$0xff]
    %v112 = vld [vmem:[%s0 + $0x50] sm:$0xff]
    %v113 = vld [vmem:[%s0 + $0x58] sm:$0xff]
    %v114 = vld [vmem:[%s0 + $0x60] sm:$0xff]
    %v115 = vld [vmem:[%s0 + $0x68] sm:$0xff]
    %v116 = vld [vmem:[%s0 + $0x70] sm:$0xff]
    %v117 = vld [vmem:[%s0 + $0x78] sm:$0xff]
    %v118 = vld [vmem:[%s6] sm:$0xff]
    %v119 = vld [vmem:[%s6 + $0x8] sm:$0xff]
    %v120 = vld [vmem:[%s6 + $0x10] sm:$0xff]
    %v121 = vld [vmem:[%s6 + $0x18] sm:$0xff]
    %v122 = vld [vmem:[%s6 + $0x20] sm:$0xff]
    %v123 = vld [vmem:[%s6 + $0x28] sm:$0xff]
    %v124 = vld [vmem:[%s6 + $0x30] sm:$0xff]
    %v125 = vld [vmem:[%s6 + $0x38] sm:$0xff]
    %v126 = vld [vmem:[%s6 + $0x40] sm:$0xff]
    %v127 = vld [vmem:[%s6 + $0x48] sm:$0xff]
    %v128 = vld [vmem:[%s6 + $0x50] sm:$0xff]
    %v129 = vld [vmem:[%s6 + $0x58] sm:$0xff]
    %v130 = vld [vmem:[%s6 + $0x60] sm:$0xff]
    %v131 = vld [vmem:[%s6 + $0x68] sm:$0xff]
    %v132 = vld [vmem:[%s6 + $0x70] sm:$0xff]
    %v133 = vld [vmem:[%s6 + $0x78] sm:$0xff]
    %v134 = vld [vmem:[%s7] sm:$0x1]
    %v136 = vperm.slane %v134, 0
    %138 = vmatpush.msra.mxu0 %v133
    %139 = vmatpush.msra.mxu0 %v132
    %140 = vmatpush.msra.mxu0 %v131
    %141 = vmatpush.msra.mxu0 %v130
    %142 = vmatpush.msra.mxu0 %v129
    %143 = vmatpush.msra.mxu0 %v128
    %144 = vmatpush.msra.mxu0 %v127
    %145 = vmatpush.msra.mxu0 %v126
    %146 = vmatpush.msra.mxu0 %v125
    %147 = vmatpush.msra.mxu0 %v124
    %148 = vmatpush.msra.mxu0 %v123
    %149 = vmatpush.msra.mxu0 %v122
    %150 = vmatpush.msra.mxu0 %v121
    %151 = vmatpush.msra.mxu0 %v120
    %152 = vmatpush.msra.mxu0 %v119
    %153 = vmatpush.msra.mxu0 %v118
    %154 = vmatmul.f32.gmra.mxu0 %v102
    %v155 = vpop.f32.mrf.mxu0
    %v156 = vadd.f32 %v136, %v155
    %157 = vmatmul.f32.gmra.mxu0 %v103
    %v158 = vpop.f32.mrf.mxu0
    %v159 = vadd.f32 %v136, %v158
    %160 = vmatmul.f32.gmra.mxu0 %v104
    %v161 = vpop.f32.mrf.mxu0
    %v162 = vadd.f32 %v136, %v161
    %163 = vmatmul.f32.gmra.mxu0 %v105
    %v164 = vpop.f32.mrf.mxu0
    %v165 = vadd.f32 %v136, %v164
    %166 = vmatmul.f32.gmra.mxu0 %v106
    %v167 = vpop.f32.mrf.mxu0
    %v168 = vadd.f32 %v136, %v167
    %169 = vmatmul.f32.gmra.mxu0 %v107
    %v170 = vpop.f32.mrf.mxu0
    %v171 = vadd.f32 %v136, %v170
    %172 = vmatmul.f32.gmra.mxu0 %v108
    %v173 = vpop.f32.mrf.mxu0
    %v174 = vadd.f32 %v136, %v173
    %175 = vmatmul.f32.gmra.mxu0 %v109
    %v176 = vpop.f32.mrf.mxu0
    %v177 = vadd.f32 %v136, %v176
    %178 = vmatmul.f32.gmra.mxu0 %v110
    %v179 = vpop.f32.mrf.mxu0
    %v180 = vadd.f32 %v136, %v179
    %181 = vmatmul.f32.gmra.mxu0 %v111
    %v182 = vpop.f32.mrf.mxu0
    %v183 = vadd.f32 %v136, %v182
    %184 = vmatmul.f32.gmra.mxu0 %v112
    %v185 = vpop.f32.mrf.mxu0
    %v186 = vadd.f32 %v136, %v185
    %187 = vmatmul.f32.gmra.mxu0 %v113
    %v188 = vpop.f32.mrf.mxu0
    %v189 = vadd.f32 %v136, %v188
    %190 = vmatmul.f32.gmra.mxu0 %v114
    %v191 = vpop.f32.mrf.mxu0
    %v192 = vadd.f32 %v136, %v191
    %193 = vmatmul.f32.gmra.mxu0 %v115
    %v194 = vpop.f32.mrf.mxu0
    %v195 = vadd.f32 %v136, %v194
    %196 = vmatmul.f32.gmra.mxu0 %v116
    %v197 = vpop.f32.mrf.mxu0
    %v198 = vadd.f32 %v136, %v197
    %199 = vmatmul.f32.gmra.mxu0 %v117
    %v200 = vpop.f32.mrf.mxu0
    %v201 = vadd.f32 %v136, %v200
    %202 = vdwg.mxu0
    %v203 = vld [vmem:[%s1] sm:$0xff]
    %v204 = vld [vmem:[%s1 + $0x8] sm:$0xff]
    %v205 = vld [vmem:[%s1 + $0x10] sm:$0xff]
    %v206 = vld [vmem:[%s1 + $0x18] sm:$0xff]
    %v207 = vld [vmem:[%s1 + $0x20] sm:$0xff]
    %v208 = vld [vmem:[%s1 + $0x28] sm:$0xff]
    %v209 = vld [vmem:[#allocation2] sm:$0xff]
    %v210 = vld [vmem:[#allocation2 + $0x8] sm:$0xff]
    %v211 = vld [vmem:[#allocation2 + $0x10] sm:$0xff]
    %v212 = vld [vmem:[#allocation2 + $0x18] sm:$0xff]
    %v213 = vld [vmem:[#allocation2 + $0x20] sm:$0xff]
    %v214 = vld [vmem:[#allocation2 + $0x28] sm:$0xff]
    %v215 = vld [vmem:[#allocation2 + $0x30] sm:$0xff]
    %v216 = vld [vmem:[#allocation2 + $0x38] sm:$0xff]
    %v217 = vld [vmem:[#allocation2 + $0x40] sm:$0xff]
    %v218 = vld [vmem:[#allocation2 + $0x48] sm:$0xff]
    %v219 = vld [vmem:[#allocation2 + $0x50] sm:$0xff]
    %v220 = vld [vmem:[#allocation2 + $0x58] sm:$0xff]
    %v221 = vld [vmem:[#allocation2 + $0x60] sm:$0xff]
    %v222 = vld [vmem:[#allocation2 + $0x68] sm:$0xff]
    %v223 = vld [vmem:[#allocation2 + $0x70] sm:$0xff]
    %v224 = vld [vmem:[#allocation2 + $0x78] sm:$0xff]
    %v225 = vld [vmem:[%s9] sm:$0x1]
    %v227 = vperm.slane %v225, 0
    %229 = vmatpush.msra.mxu0 %v224
    %230 = vmatpush.msra.mxu0 %v223
    %231 = vmatpush.msra.mxu0 %v222
    %232 = vmatpush.msra.mxu0 %v221
    %233 = vmatpush.msra.mxu0 %v220
    %234 = vmatpush.msra.mxu0 %v219
    %235 = vmatpush.msra.mxu0 %v218
    %236 = vmatpush.msra.mxu0 %v217
    %237 = vmatpush.msra.mxu0 %v216
    %238 = vmatpush.msra.mxu0 %v215
    %239 = vmatpush.msra.mxu0 %v214
    %240 = vmatpush.msra.mxu0 %v213
    %241 = vmatpush.msra.mxu0 %v212
    %242 = vmatpush.msra.mxu0 %v211
    %243 = vmatpush.msra.mxu0 %v210
    %244 = vmatpush.msra.mxu0 %v209
    %245 = vmatmul.f32.gmra.mxu0 %v203
    %v246 = vpop.f32.mrf.mxu0
    %v247 = vadd.f32 %v227, %v246
    %248 = vmatmul.f32.gmra.mxu0 %v204
    %v249 = vpop.f32.mrf.mxu0
    %v250 = vadd.f32 %v227, %v249
    %251 = vmatmul.f32.gmra.mxu0 %v205
    %v252 = vpop.f32.mrf.mxu0
    %v253 = vadd.f32 %v227, %v252
    %254 = vmatmul.f32.gmra.mxu0 %v206
    %v255 = vpop.f32.mrf.mxu0
    %v256 = vadd.f32 %v227, %v255
    %257 = vmatmul.f32.gmra.mxu0 %v207
    %v258 = vpop.f32.mrf.mxu0
    %v259 = vadd.f32 %v227, %v258
    %260 = vmatmul.f32.gmra.mxu0 %v208
    %v261 = vpop.f32.mrf.mxu0
    %v262 = vadd.f32 %v227, %v261
    %263 = vdwg.mxu0
    %v264 = vld [vmem:[%s3] sm:$0xf]
    %v265 = vld [vmem:[%s3 + $0x4] sm:$0xf]
    %v266 = vld [vmem:[%s3 + $0x8] sm:$0xf]
    %v267 = vld [vmem:[%s3 + $0xc] sm:$0xf]
    %v268 = vld [vmem:[%s3 + $0x10] sm:$0xf]
    %v269 = vld [vmem:[%s3 + $0x14] sm:$0xf]
    %v270 = vunpack.c.l.bf16 %v264
    %v271 = vunpack.c.l.bf16 %v265
    %v272 = vunpack.c.l.bf16 %v266
    %v273 = vunpack.c.l.bf16 %v267
    %v274 = vunpack.c.l.bf16 %v268
    %v275 = vunpack.c.l.bf16 %v269
    %v276 = vld [vmem:[%s4] sm:$0xf]
    %v277 = vld [vmem:[%s4 + $0x4] sm:$0xf]
    %v278 = vld [vmem:[%s4 + $0x8] sm:$0xf]
    %v279 = vld [vmem:[%s4 + $0xc] sm:$0xf]
    %v280 = vld [vmem:[%s4 + $0x10] sm:$0xf]
    %v281 = vld [vmem:[%s4 + $0x14] sm:$0xf]
    %v282 = vunpack.c.l.bf16 %v276
    %v283 = vunpack.c.l.bf16 %v277
    %v284 = vunpack.c.l.bf16 %v278
    %v285 = vunpack.c.l.bf16 %v279
    %v286 = vunpack.c.l.bf16 %v280
    %v287 = vunpack.c.l.bf16 %v281
    %v288 = vld [vmem:[%s2] sm:$0xff]
    %v289 = vld [vmem:[%s2 + $0x8] sm:$0xff]
    %v290 = vld [vmem:[%s2 + $0x10] sm:$0xff]
    %v291 = vld [vmem:[%s2 + $0x18] sm:$0xff]
    %v292 = vld [vmem:[%s2 + $0x20] sm:$0xff]
    %v293 = vld [vmem:[%s2 + $0x28] sm:$0xff]
    %294 = vmatpush.msra.mxu0 %v201
    %295 = vmatpush.msra.mxu0 %v198
    %296 = vmatpush.msra.mxu0 %v195
    %297 = vmatpush.msra.mxu0 %v192
    %298 = vmatpush.msra.mxu0 %v189
    %299 = vmatpush.msra.mxu0 %v186
    %300 = vmatpush.msra.mxu0 %v183
    %301 = vmatpush.msra.mxu0 %v180
    %302 = vmatpush.msra.mxu0 %v177
    %303 = vmatpush.msra.mxu0 %v174
    %304 = vmatpush.msra.mxu0 %v171
    %305 = vmatpush.msra.mxu0 %v168
    %306 = vmatpush.msra.mxu0 %v165
    %307 = vmatpush.msra.mxu0 %v162
    %308 = vmatpush.msra.mxu0 %v159
    %309 = vmatpush.msra.mxu0 %v156
    %310 = vmatmul.f32.gmra.mxu0 %v270
    %v311 = vpop.f32.mrf.mxu0
    %v312 = vadd.f32 %v247, %v311
    %313 = vmatmul.f32.gmra.mxu0 %v271
    %v314 = vpop.f32.mrf.mxu0
    %v315 = vadd.f32 %v250, %v314
    %316 = vmatmul.f32.gmra.mxu0 %v272
    %v317 = vpop.f32.mrf.mxu0
    %v318 = vadd.f32 %v253, %v317
    %319 = vmatmul.f32.gmra.mxu0 %v273
    %v320 = vpop.f32.mrf.mxu0
    %v321 = vadd.f32 %v256, %v320
    %322 = vmatmul.f32.gmra.mxu0 %v274
    %v323 = vpop.f32.mrf.mxu0
    %v324 = vadd.f32 %v259, %v323
    %325 = vmatmul.f32.gmra.mxu0 %v275
    %v326 = vpop.f32.mrf.mxu0
    %v327 = vadd.f32 %v262, %v326
    %328 = vdwg.mxu0
    %v329 = vmax.f32 %v312, 0.0
    %v330 = vmax.f32 %v315, 0.0
    %v331 = vmax.f32 %v318, 0.0
    %v332 = vmax.f32 %v321, 0.0
    %v333 = vmax.f32 %v324, 0.0
    %v334 = vmax.f32 %v327, 0.0
    %336 = vset.pattern.permute.xlu0 0
    %337 = vperm.xlu0 %336, %v288
    %v338 = vpop.permute.xlu0 %337
    %341 = vset.pattern.permute.xlu0 0
    %342 = vperm.xlu0 %341, %v289
    %v343 = vpop.permute.xlu0 %342
    %346 = vset.pattern.permute.xlu0 0
    %347 = vperm.xlu0 %346, %v290
    %v348 = vpop.permute.xlu0 %347
    %351 = vset.pattern.permute.xlu0 0
    %352 = vperm.xlu0 %351, %v291
    %v353 = vpop.permute.xlu0 %352
    %356 = vset.pattern.permute.xlu0 0
    %357 = vperm.xlu0 %356, %v292
    %v358 = vpop.permute.xlu0 %357
    %361 = vset.pattern.permute.xlu0 0
    %362 = vperm.xlu0 %361, %v293
    %v363 = vpop.permute.xlu0 %362
    %v365 = vmul.f32 %v329, %v338
    %v366 = vmul.f32 %v330, %v343
    %v367 = vmul.f32 %v331, %v348
    %v368 = vmul.f32 %v332, %v353
    %v369 = vmul.f32 %v333, %v358
    %v370 = vmul.f32 %v334, %v363
    %371 = vxpose.xlu0.b32.start [1/16] %v282, 128
    %372 = vxpose.xlu0.b32.cont [2/16] %v283, 128
    %373 = vxpose.xlu0.b32.cont [3/16] %v284, 128
    %374 = vxpose.xlu0.b32.cont [4/16] %v285, 128
    %375 = vxpose.xlu0.b32.cont [5/16] %v286, 128
    %376 = vxpose.xlu0.b32.cont [6/16] %v287, 128
    %377 = vxpose.xlu0.b32.cont [7/16] 0.0, 128
    %378 = vxpose.xlu0.b32.cont [8/16] 0.0, 128
    %379 = vxpose.xlu0.b32.cont [9/16] 0.0, 128
    %380 = vxpose.xlu0.b32.cont [10/16] 0.0, 128
    %381 = vxpose.xlu0.b32.cont [11/16] 0.0, 128
    %382 = vxpose.xlu0.b32.cont [12/16] 0.0, 128
    %383 = vxpose.xlu0.b32.cont [13/16] 0.0, 128
    %384 = vxpose.xlu0.b32.cont [14/16] 0.0, 128
    %385 = vxpose.xlu0.b32.cont [15/16] 0.0, 128
    %386 = vxpose.xlu0.b32.end [16/16] 0.0, 128
    %v387 = vpop.trf.xlu0
    %v388 = vpop.trf.xlu0
    %v389 = vpop.trf.xlu0
    %v390 = vpop.trf.xlu0
    %v391 = vpop.trf.xlu0
    %v392 = vpop.trf.xlu0
    %v393 = vpop.trf.xlu0
    %v394 = vpop.trf.xlu0
    %v395 = vpop.trf.xlu0
    %v396 = vpop.trf.xlu0
    %v397 = vpop.trf.xlu0
    %v398 = vpop.trf.xlu0
    %v399 = vpop.trf.xlu0
    %v400 = vpop.trf.xlu0
    %v401 = vpop.trf.xlu0
    %v402 = vpop.trf.xlu0
    %vm403 = vcmask 392192
    %v405 = vsel %vm403, %v387, 0
    %v408 = vsel %vm403, %v388, 0
    %v411 = vsel %vm403, %v389, 0
    %v414 = vsel %vm403, %v390, 0
    %v417 = vsel %vm403, %v391, 0
    %v420 = vsel %vm403, %v392, 0
    %v423 = vsel %vm403, %v393, 0
    %v426 = vsel %vm403, %v394, 0
    %v429 = vsel %vm403, %v395, 0
    %v432 = vsel %vm403, %v396, 0
    %v435 = vsel %vm403, %v397, 0
    %v438 = vsel %vm403, %v398, 0
    %v441 = vsel %vm403, %v399, 0
    %v444 = vsel %vm403, %v400, 0
    %v447 = vsel %vm403, %v401, 0
    %v450 = vsel %vm403, %v402, 0
    %452 = vmatpush.msra.mxu0 0.0
    %453 = vmatpush.msra.mxu0 0.0
    %454 = vmatpush.msra.mxu0 0.0
    %455 = vmatpush.msra.mxu0 0.0
    %456 = vmatpush.msra.mxu0 0.0
    %457 = vmatpush.msra.mxu0 0.0
    %458 = vmatpush.msra.mxu0 0.0
    %459 = vmatpush.msra.mxu0 0.0
    %460 = vmatpush.msra.mxu0 0.0
    %461 = vmatpush.msra.mxu0 0.0
    %462 = vmatpush.msra.mxu0 %v370
    %463 = vmatpush.msra.mxu0 %v369
    %464 = vmatpush.msra.mxu0 %v368
    %465 = vmatpush.msra.mxu0 %v367
    %466 = vmatpush.msra.mxu0 %v366
    %467 = vmatpush.msra.mxu0 %v365
    %468 = vmatmul.f32.gmra.mxu0 %v405
    %v469 = vpop.f32.mrf.mxu0
    %v470 = vadd.f32 %v156, %v469
    %471 = vmatmul.f32.gmra.mxu0 %v408
    %v472 = vpop.f32.mrf.mxu0
    %v473 = vadd.f32 %v159, %v472
    %474 = vmatmul.f32.gmra.mxu0 %v411
    %v475 = vpop.f32.mrf.mxu0
    %v476 = vadd.f32 %v162, %v475
    %477 = vmatmul.f32.gmra.mxu0 %v414
    %v478 = vpop.f32.mrf.mxu0
    %v479 = vadd.f32 %v165, %v478
    %480 = vmatmul.f32.gmra.mxu0 %v417
    %v481 = vpop.f32.mrf.mxu0
    %v482 = vadd.f32 %v168, %v481
    %483 = vmatmul.f32.gmra.mxu0 %v420
    %v484 = vpop.f32.mrf.mxu0
    %v485 = vadd.f32 %v171, %v484
    %486 = vmatmul.f32.gmra.mxu0 %v423
    %v487 = vpop.f32.mrf.mxu0
    %v488 = vadd.f32 %v174, %v487
    %489 = vmatmul.f32.gmra.mxu0 %v426
    %v490 = vpop.f32.mrf.mxu0
    %v491 = vadd.f32 %v177, %v490
    %492 = vmatmul.f32.gmra.mxu0 %v429
    %v493 = vpop.f32.mrf.mxu0
    %v494 = vadd.f32 %v180, %v493
    %495 = vmatmul.f32.gmra.mxu0 %v432
    %v496 = vpop.f32.mrf.mxu0
    %v497 = vadd.f32 %v183, %v496
    %498 = vmatmul.f32.gmra.mxu0 %v435
    %v499 = vpop.f32.mrf.mxu0
    %v500 = vadd.f32 %v186, %v499
    %501 = vmatmul.f32.gmra.mxu0 %v438
    %v502 = vpop.f32.mrf.mxu0
    %v503 = vadd.f32 %v189, %v502
    %504 = vmatmul.f32.gmra.mxu0 %v441
    %v505 = vpop.f32.mrf.mxu0
    %v506 = vadd.f32 %v192, %v505
    %507 = vmatmul.f32.gmra.mxu0 %v444
    %v508 = vpop.f32.mrf.mxu0
    %v509 = vadd.f32 %v195, %v508
    %510 = vmatmul.f32.gmra.mxu0 %v447
    %v511 = vpop.f32.mrf.mxu0
    %v512 = vadd.f32 %v198, %v511
    %513 = vmatmul.f32.gmra.mxu0 %v450
    %v514 = vpop.f32.mrf.mxu0
    %v515 = vadd.f32 %v201, %v514
    %516 = vdwg.mxu0
    %v517 = vld [vmem:[%s10] sm:$0xff]
    %v518 = vld [vmem:[%s10 + $0x8] sm:$0xff]
    %v519 = vld [vmem:[%s10 + $0x10] sm:$0xff]
    %v520 = vld [vmem:[%s10 + $0x18] sm:$0xff]
    %v521 = vld [vmem:[%s10 + $0x20] sm:$0xff]
    %v522 = vld [vmem:[%s10 + $0x28] sm:$0xff]
    %v523 = vld [vmem:[%s10 + $0x30] sm:$0xff]
    %v524 = vld [vmem:[%s10 + $0x38] sm:$0xff]
    %v525 = vld [vmem:[%s10 + $0x40] sm:$0xff]
    %v526 = vld [vmem:[%s10 + $0x48] sm:$0xff]
    %v527 = vld [vmem:[%s10 + $0x50] sm:$0xff]
    %v528 = vld [vmem:[%s10 + $0x58] sm:$0xff]
    %v529 = vld [vmem:[%s10 + $0x60] sm:$0xff]
    %v530 = vld [vmem:[%s10 + $0x68] sm:$0xff]
    %v531 = vld [vmem:[%s10 + $0x70] sm:$0xff]
    %v532 = vld [vmem:[%s10 + $0x78] sm:$0xff]
    %v533 = vld [vmem:[%s11] sm:$0x1]
    %v535 = vperm.slane %v533, 0
    %537 = vmatpush.msra.mxu0 %v532
    %538 = vmatpush.msra.mxu0 %v531
    %539 = vmatpush.msra.mxu0 %v530
    %540 = vmatpush.msra.mxu0 %v529
    %541 = vmatpush.msra.mxu0 %v528
    %542 = vmatpush.msra.mxu0 %v527
    %543 = vmatpush.msra.mxu0 %v526
    %544 = vmatpush.msra.mxu0 %v525
    %545 = vmatpush.msra.mxu0 %v524
    %546 = vmatpush.msra.mxu0 %v523
    %547 = vmatpush.msra.mxu0 %v522
    %548 = vmatpush.msra.mxu0 %v521
    %549 = vmatpush.msra.mxu0 %v520
    %550 = vmatpush.msra.mxu0 %v519
    %551 = vmatpush.msra.mxu0 %v518
    %552 = vmatpush.msra.mxu0 %v517
    %553 = vmatmul.f32.gmra.mxu0 %v470
    %v554 = vpop.f32.mrf.mxu0
    %v555 = vadd.f32 %v535, %v554
    %556 = vmatmul.f32.gmra.mxu0 %v473
    %v557 = vpop.f32.mrf.mxu0
    %v558 = vadd.f32 %v535, %v557
    %559 = vmatmul.f32.gmra.mxu0 %v476
    %v560 = vpop.f32.mrf.mxu0
    %v561 = vadd.f32 %v535, %v560
    %562 = vmatmul.f32.gmra.mxu0 %v479
    %v563 = vpop.f32.mrf.mxu0
    %v564 = vadd.f32 %v535, %v563
    %565 = vmatmul.f32.gmra.mxu0 %v482
    %v566 = vpop.f32.mrf.mxu0
    %v567 = vadd.f32 %v535, %v566
    %568 = vmatmul.f32.gmra.mxu0 %v485
    %v569 = vpop.f32.mrf.mxu0
    %v570 = vadd.f32 %v535, %v569
    %571 = vmatmul.f32.gmra.mxu0 %v488
    %v572 = vpop.f32.mrf.mxu0
    %v573 = vadd.f32 %v535, %v572
    %574 = vmatmul.f32.gmra.mxu0 %v491
    %v575 = vpop.f32.mrf.mxu0
    %v576 = vadd.f32 %v535, %v575
    %577 = vmatmul.f32.gmra.mxu0 %v494
    %v578 = vpop.f32.mrf.mxu0
    %v579 = vadd.f32 %v535, %v578
    %580 = vmatmul.f32.gmra.mxu0 %v497
    %v581 = vpop.f32.mrf.mxu0
    %v582 = vadd.f32 %v535, %v581
    %583 = vmatmul.f32.gmra.mxu0 %v500
    %v584 = vpop.f32.mrf.mxu0
    %v585 = vadd.f32 %v535, %v584
    %586 = vmatmul.f32.gmra.mxu0 %v503
    %v587 = vpop.f32.mrf.mxu0
    %v588 = vadd.f32 %v535, %v587
    %589 = vmatmul.f32.gmra.mxu0 %v506
    %v590 = vpop.f32.mrf.mxu0
    %v591 = vadd.f32 %v535, %v590
    %592 = vmatmul.f32.gmra.mxu0 %v509
    %v593 = vpop.f32.mrf.mxu0
    %v594 = vadd.f32 %v535, %v593
    %595 = vmatmul.f32.gmra.mxu0 %v512
    %v596 = vpop.f32.mrf.mxu0
    %v597 = vadd.f32 %v535, %v596
    %598 = vmatmul.f32.gmra.mxu0 %v515
    %v599 = vpop.f32.mrf.mxu0
    %v600 = vadd.f32 %v535, %v599
    %601 = vdwg.mxu0
    %v602 = vmax.f32 %v555, 0.0
    %v603 = vmax.f32 %v558, 0.0
    %v604 = vmax.f32 %v561, 0.0
    %v605 = vmax.f32 %v564, 0.0
    %v606 = vmax.f32 %v567, 0.0
    %v607 = vmax.f32 %v570, 0.0
    %v608 = vmax.f32 %v573, 0.0
    %v609 = vmax.f32 %v576, 0.0
    %v610 = vmax.f32 %v579, 0.0
    %v611 = vmax.f32 %v582, 0.0
    %v612 = vmax.f32 %v585, 0.0
    %v613 = vmax.f32 %v588, 0.0
    %v614 = vmax.f32 %v591, 0.0
    %v615 = vmax.f32 %v594, 0.0
    %v616 = vmax.f32 %v597, 0.0
    %v617 = vmax.f32 %v600, 0.0
    %v618 = vld [vmem:[#allocation4] sm:$0xff]
    %v619 = vld [vmem:[#allocation4 + $0x8] sm:$0xff]
    %v620 = vld [vmem:[#allocation4 + $0x10] sm:$0xff]
    %v621 = vld [vmem:[#allocation4 + $0x18] sm:$0xff]
    %v622 = vld [vmem:[#allocation4 + $0x20] sm:$0xff]
    %v623 = vld [vmem:[#allocation4 + $0x28] sm:$0xff]
    %v624 = vld [vmem:[#allocation4 + $0x30] sm:$0xff]
    %v625 = vld [vmem:[#allocation4 + $0x38] sm:$0xff]
    %v626 = vld [vmem:[#allocation4 + $0x40] sm:$0xff]
    %v627 = vld [vmem:[#allocation4 + $0x48] sm:$0xff]
    %v628 = vld [vmem:[#allocation4 + $0x50] sm:$0xff]
    %v629 = vld [vmem:[#allocation4 + $0x58] sm:$0xff]
    %v630 = vld [vmem:[#allocation4 + $0x60] sm:$0xff]
    %v631 = vld [vmem:[#allocation4 + $0x68] sm:$0xff]
    %v632 = vld [vmem:[#allocation4 + $0x70] sm:$0xff]
    %v633 = vld [vmem:[#allocation4 + $0x78] sm:$0xff]
    %v634 = vld [vmem:[%s13] sm:$0x1]
    %v636 = vperm.slane %v634, 0
    %638 = vmatpush.msra.mxu0 %v633
    %639 = vmatpush.msra.mxu0 %v632
    %640 = vmatpush.msra.mxu0 %v631
    %641 = vmatpush.msra.mxu0 %v630
    %642 = vmatpush.msra.mxu0 %v629
    %643 = vmatpush.msra.mxu0 %v628
    %644 = vmatpush.msra.mxu0 %v627
    %645 = vmatpush.msra.mxu0 %v626
    %646 = vmatpush.msra.mxu0 %v625
    %647 = vmatpush.msra.mxu0 %v624
    %648 = vmatpush.msra.mxu0 %v623
    %649 = vmatpush.msra.mxu0 %v622
    %650 = vmatpush.msra.mxu0 %v621
    %651 = vmatpush.msra.mxu0 %v620
    %652 = vmatpush.msra.mxu0 %v619
    %653 = vmatpush.msra.mxu0 %v618
    %654 = vmatmul.f32.gmra.mxu0 %v602
    %v655 = vpop.f32.mrf.mxu0
    %v656 = vadd.f32 %v636, %v655
    %657 = vmatmul.f32.gmra.mxu0 %v603
    %v658 = vpop.f32.mrf.mxu0
    %v659 = vadd.f32 %v636, %v658
    %660 = vmatmul.f32.gmra.mxu0 %v604
    %v661 = vpop.f32.mrf.mxu0
    %v662 = vadd.f32 %v636, %v661
    %663 = vmatmul.f32.gmra.mxu0 %v605
    %v664 = vpop.f32.mrf.mxu0
    %v665 = vadd.f32 %v636, %v664
    %666 = vmatmul.f32.gmra.mxu0 %v606
    %v667 = vpop.f32.mrf.mxu0
    %v668 = vadd.f32 %v636, %v667
    %669 = vmatmul.f32.gmra.mxu0 %v607
    %v670 = vpop.f32.mrf.mxu0
    %v671 = vadd.f32 %v636, %v670
    %672 = vmatmul.f32.gmra.mxu0 %v608
    %v673 = vpop.f32.mrf.mxu0
    %v674 = vadd.f32 %v636, %v673
    %675 = vmatmul.f32.gmra.mxu0 %v609
    %v676 = vpop.f32.mrf.mxu0
    %v677 = vadd.f32 %v636, %v676
    %678 = vmatmul.f32.gmra.mxu0 %v610
    %v679 = vpop.f32.mrf.mxu0
    %v680 = vadd.f32 %v636, %v679
    %681 = vmatmul.f32.gmra.mxu0 %v611
    %v682 = vpop.f32.mrf.mxu0
    %v683 = vadd.f32 %v636, %v682
    %684 = vmatmul.f32.gmra.mxu0 %v612
    %v685 = vpop.f32.mrf.mxu0
    %v686 = vadd.f32 %v636, %v685
    %687 = vmatmul.f32.gmra.mxu0 %v613
    %v688 = vpop.f32.mrf.mxu0
    %v689 = vadd.f32 %v636, %v688
    %690 = vmatmul.f32.gmra.mxu0 %v614
    %v691 = vpop.f32.mrf.mxu0
    %v692 = vadd.f32 %v636, %v691
    %693 = vmatmul.f32.gmra.mxu0 %v615
    %v694 = vpop.f32.mrf.mxu0
    %v695 = vadd.f32 %v636, %v694
    %696 = vmatmul.f32.gmra.mxu0 %v616
    %v697 = vpop.f32.mrf.mxu0
    %v698 = vadd.f32 %v636, %v697
    %699 = vmatmul.f32.gmra.mxu0 %v617
    %v700 = vpop.f32.mrf.mxu0
    %v701 = vadd.f32 %v636, %v700
    %702 = vdwg.mxu0
    %v703 = vmax.f32 %v656, 0.0
    %v704 = vmax.f32 %v659, 0.0
    %v705 = vmax.f32 %v662, 0.0
    %v706 = vmax.f32 %v665, 0.0
    %v707 = vmax.f32 %v668, 0.0
    %v708 = vmax.f32 %v671, 0.0
    %v709 = vmax.f32 %v674, 0.0
    %v710 = vmax.f32 %v677, 0.0
    %v711 = vmax.f32 %v680, 0.0
    %v712 = vmax.f32 %v683, 0.0
    %v713 = vmax.f32 %v686, 0.0
    %v714 = vmax.f32 %v689, 0.0
    %v715 = vmax.f32 %v692, 0.0
    %v716 = vmax.f32 %v695, 0.0
    %v717 = vmax.f32 %v698, 0.0
    %v718 = vmax.f32 %v701, 0.0
    %719 = vmatpush.msra.mxu0 %v718
    %720 = vmatpush.msra.mxu0 %v717
    %721 = vmatpush.msra.mxu0 %v716
    %722 = vmatpush.msra.mxu0 %v715
    %723 = vmatpush.msra.mxu0 %v714
    %724 = vmatpush.msra.mxu0 %v713
    %725 = vmatpush.msra.mxu0 %v712
    %726 = vmatpush.msra.mxu0 %v711
    %727 = vmatpush.msra.mxu0 %v710
    %728 = vmatpush.msra.mxu0 %v709
    %729 = vmatpush.msra.mxu0 %v708
    %730 = vmatpush.msra.mxu0 %v707
    %731 = vmatpush.msra.mxu0 %v706
    %732 = vmatpush.msra.mxu0 %v705
    %733 = vmatpush.msra.mxu0 %v704
    %734 = vmatpush.msra.mxu0 %v703
    %735 = vmatmul.f32.gmra.mxu0 %v270
    %v736 = vpop.f32.mrf.mxu0
    %v737 = vadd.f32 %v247, %v736
    %738 = vmatmul.f32.gmra.mxu0 %v271
    %v739 = vpop.f32.mrf.mxu0
    %v740 = vadd.f32 %v250, %v739
    %741 = vmatmul.f32.gmra.mxu0 %v272
    %v742 = vpop.f32.mrf.mxu0
    %v743 = vadd.f32 %v253, %v742
    %744 = vmatmul.f32.gmra.mxu0 %v273
    %v745 = vpop.f32.mrf.mxu0
    %v746 = vadd.f32 %v256, %v745
    %747 = vmatmul.f32.gmra.mxu0 %v274
    %v748 = vpop.f32.mrf.mxu0
    %v749 = vadd.f32 %v259, %v748
    %750 = vmatmul.f32.gmra.mxu0 %v275
    %v751 = vpop.f32.mrf.mxu0
    %v752 = vadd.f32 %v262, %v751
    %753 = vdwg.mxu0
    %v754 = vmax.f32 %v737, 0.0
    %v755 = vmax.f32 %v740, 0.0
    %v756 = vmax.f32 %v743, 0.0
    %v757 = vmax.f32 %v746, 0.0
    %v758 = vmax.f32 %v749, 0.0
    %v759 = vmax.f32 %v752, 0.0
    %v760 = vmul.f32 %v754, %v338
    %v761 = vmul.f32 %v755, %v343
    %v762 = vmul.f32 %v756, %v348
    %v763 = vmul.f32 %v757, %v353
    %v764 = vmul.f32 %v758, %v358
    %v765 = vmul.f32 %v759, %v363
    %766 = vmatpush.msra.mxu0 0.0
    %767 = vmatpush.msra.mxu0 0.0
    %768 = vmatpush.msra.mxu0 0.0
    %769 = vmatpush.msra.mxu0 0.0
    %770 = vmatpush.msra.mxu0 0.0
    %771 = vmatpush.msra.mxu0 0.0
    %772 = vmatpush.msra.mxu0 0.0
    %773 = vmatpush.msra.mxu0 0.0
    %774 = vmatpush.msra.mxu0 0.0
    %775 = vmatpush.msra.mxu0 0.0
    %776 = vmatpush.msra.mxu0 %v765
    %777 = vmatpush.msra.mxu0 %v764
    %778 = vmatpush.msra.mxu0 %v763
    %779 = vmatpush.msra.mxu0 %v762
    %780 = vmatpush.msra.mxu0 %v761
    %781 = vmatpush.msra.mxu0 %v760
    %782 = vmatmul.f32.gmra.mxu0 %v405
    %v783 = vpop.f32.mrf.mxu0
    %v784 = vadd.f32 %v703, %v783
    %785 = vmatmul.f32.gmra.mxu0 %v408
    %v786 = vpop.f32.mrf.mxu0
    %v787 = vadd.f32 %v704, %v786
    %788 = vmatmul.f32.gmra.mxu0 %v411
    %v789 = vpop.f32.mrf.mxu0
    %v790 = vadd.f32 %v705, %v789
    %791 = vmatmul.f32.gmra.mxu0 %v414
    %v792 = vpop.f32.mrf.mxu0
    %v793 = vadd.f32 %v706, %v792
    %794 = vmatmul.f32.gmra.mxu0 %v417
    %v795 = vpop.f32.mrf.mxu0
    %v796 = vadd.f32 %v707, %v795
    %797 = vmatmul.f32.gmra.mxu0 %v420
    %v798 = vpop.f32.mrf.mxu0
    %v799 = vadd.f32 %v708, %v798
    %800 = vmatmul.f32.gmra.mxu0 %v423
    %v801 = vpop.f32.mrf.mxu0
    %v802 = vadd.f32 %v709, %v801
    %803 = vmatmul.f32.gmra.mxu0 %v426
    %v804 = vpop.f32.mrf.mxu0
    %v805 = vadd.f32 %v710, %v804
    %806 = vmatmul.f32.gmra.mxu0 %v429
    %v807 = vpop.f32.mrf.mxu0
    %v808 = vadd.f32 %v711, %v807
    %809 = vmatmul.f32.gmra.mxu0 %v432
    %v810 = vpop.f32.mrf.mxu0
    %v811 = vadd.f32 %v712, %v810
    %812 = vmatmul.f32.gmra.mxu0 %v435
    %v813 = vpop.f32.mrf.mxu0
    %v814 = vadd.f32 %v713, %v813
    %815 = vmatmul.f32.gmra.mxu0 %v438
    %v816 = vpop.f32.mrf.mxu0
    %v817 = vadd.f32 %v714, %v816
    %818 = vmatmul.f32.gmra.mxu0 %v441
    %v819 = vpop.f32.mrf.mxu0
    %v820 = vadd.f32 %v715, %v819
    %821 = vmatmul.f32.gmra.mxu0 %v444
    %v822 = vpop.f32.mrf.mxu0
    %v823 = vadd.f32 %v716, %v822
    %824 = vmatmul.f32.gmra.mxu0 %v447
    %v825 = vpop.f32.mrf.mxu0
    %v826 = vadd.f32 %v717, %v825
    %827 = vmatmul.f32.gmra.mxu0 %v450
    %v828 = vpop.f32.mrf.mxu0
    %v829 = vadd.f32 %v718, %v828
    %830 = vdwg.mxu0
    %s831 = scalar_lea.vmem %s10, 128
    %v832 = vld [vmem:[%s831] sm:$0xff]
    %v833 = vld [vmem:[%s831 + $0x8] sm:$0xff]
    %v834 = vld [vmem:[%s831 + $0x10] sm:$0xff]
    %v835 = vld [vmem:[%s831 + $0x18] sm:$0xff]
    %v836 = vld [vmem:[%s831 + $0x20] sm:$0xff]
    %v837 = vld [vmem:[%s831 + $0x28] sm:$0xff]
    %v838 = vld [vmem:[%s831 + $0x30] sm:$0xff]
    %v839 = vld [vmem:[%s831 + $0x38] sm:$0xff]
    %v840 = vld [vmem:[%s831 + $0x40] sm:$0xff]
    %v841 = vld [vmem:[%s831 + $0x48] sm:$0xff]
    %v842 = vld [vmem:[%s831 + $0x50] sm:$0xff]
    %v843 = vld [vmem:[%s831 + $0x58] sm:$0xff]
    %v844 = vld [vmem:[%s831 + $0x60] sm:$0xff]
    %v845 = vld [vmem:[%s831 + $0x68] sm:$0xff]
    %v846 = vld [vmem:[%s831 + $0x70] sm:$0xff]
    %v847 = vld [vmem:[%s831 + $0x78] sm:$0xff]
    %s848 = scalar_lea.vmem %s11, 1
    %v849 = vld [vmem:[%s848] sm:$0x1]
    %v851 = vperm.slane %v849, 0
    %853 = vmatpush.msra.mxu0 %v847
    %854 = vmatpush.msra.mxu0 %v846
    %855 = vmatpush.msra.mxu0 %v845
    %856 = vmatpush.msra.mxu0 %v844
    %857 = vmatpush.msra.mxu0 %v843
    %858 = vmatpush.msra.mxu0 %v842
    %859 = vmatpush.msra.mxu0 %v841
    %860 = vmatpush.msra.mxu0 %v840
    %861 = vmatpush.msra.mxu0 %v839
    %862 = vmatpush.msra.mxu0 %v838
    %863 = vmatpush.msra.mxu0 %v837
    %864 = vmatpush.msra.mxu0 %v836
    %865 = vmatpush.msra.mxu0 %v835
    %866 = vmatpush.msra.mxu0 %v834
    %867 = vmatpush.msra.mxu0 %v833
    %868 = vmatpush.msra.mxu0 %v832
    %869 = vmatmul.f32.gmra.mxu0 %v784
    %v870 = vpop.f32.mrf.mxu0
    %v871 = vadd.f32 %v851, %v870
    %872 = vmatmul.f32.gmra.mxu0 %v787
    %v873 = vpop.f32.mrf.mxu0
    %v874 = vadd.f32 %v851, %v873
    %875 = vmatmul.f32.gmra.mxu0 %v790
    %v876 = vpop.f32.mrf.mxu0
    %v877 = vadd.f32 %v851, %v876
    %878 = vmatmul.f32.gmra.mxu0 %v793
    %v879 = vpop.f32.mrf.mxu0
    %v880 = vadd.f32 %v851, %v879
    %881 = vmatmul.f32.gmra.mxu0 %v796
    %v882 = vpop.f32.mrf.mxu0
    %v883 = vadd.f32 %v851, %v882
    %884 = vmatmul.f32.gmra.mxu0 %v799
    %v885 = vpop.f32.mrf.mxu0
    %v886 = vadd.f32 %v851, %v885
    %887 = vmatmul.f32.gmra.mxu0 %v802
    %v888 = vpop.f32.mrf.mxu0
    %v889 = vadd.f32 %v851, %v888
    %890 = vmatmul.f32.gmra.mxu0 %v805
    %v891 = vpop.f32.mrf.mxu0
    %v892 = vadd.f32 %v851, %v891
    %893 = vmatmul.f32.gmra.mxu0 %v808
    %v894 = vpop.f32.mrf.mxu0
    %v895 = vadd.f32 %v851, %v894
    %896 = vmatmul.f32.gmra.mxu0 %v811
    %v897 = vpop.f32.mrf.mxu0
    %v898 = vadd.f32 %v851, %v897
    %899 = vmatmul.f32.gmra.mxu0 %v814
    %v900 = vpop.f32.mrf.mxu0
    %v901 = vadd.f32 %v851, %v900
    %902 = vmatmul.f32.gmra.mxu0 %v817
    %v903 = vpop.f32.mrf.mxu0
    %v904 = vadd.f32 %v851, %v903
    %905 = vmatmul.f32.gmra.mxu0 %v820
    %v906 = vpop.f32.mrf.mxu0
    %v907 = vadd.f32 %v851, %v906
    %908 = vmatmul.f32.gmra.mxu0 %v823
    %v909 = vpop.f32.mrf.mxu0
    %v910 = vadd.f32 %v851, %v909
    %911 = vmatmul.f32.gmra.mxu0 %v826
    %v912 = vpop.f32.mrf.mxu0
    %v913 = vadd.f32 %v851, %v912
    %914 = vmatmul.f32.gmra.mxu0 %v829
    %v915 = vpop.f32.mrf.mxu0
    %v916 = vadd.f32 %v851, %v915
    %917 = vdwg.mxu0
    %v918 = vmax.f32 %v871, 0.0
    %v919 = vmax.f32 %v874, 0.0
    %v920 = vmax.f32 %v877, 0.0
    %v921 = vmax.f32 %v880, 0.0
    %v922 = vmax.f32 %v883, 0.0
    %v923 = vmax.f32 %v886, 0.0
    %v924 = vmax.f32 %v889, 0.0
    %v925 = vmax.f32 %v892, 0.0
    %v926 = vmax.f32 %v895, 0.0
    %v927 = vmax.f32 %v898, 0.0
    %v928 = vmax.f32 %v901, 0.0
    %v929 = vmax.f32 %v904, 0.0
    %v930 = vmax.f32 %v907, 0.0
    %v931 = vmax.f32 %v910, 0.0
    %v932 = vmax.f32 %v913, 0.0
    %v933 = vmax.f32 %v916, 0.0
    %s934 = scalar_lea.vmem [#allocation4], 128
    %v935 = vld [vmem:[%s934] sm:$0xff]
    %v936 = vld [vmem:[%s934 + $0x8] sm:$0xff]
    %v937 = vld [vmem:[%s934 + $0x10] sm:$0xff]
    %v938 = vld [vmem:[%s934 + $0x18] sm:$0xff]
    %v939 = vld [vmem:[%s934 + $0x20] sm:$0xff]
    %v940 = vld [vmem:[%s934 + $0x28] sm:$0xff]
    %v941 = vld [vmem:[%s934 + $0x30] sm:$0xff]
    %v942 = vld [vmem:[%s934 + $0x38] sm:$0xff]
    %v943 = vld [vmem:[%s934 + $0x40] sm:$0xff]
    %v944 = vld [vmem:[%s934 + $0x48] sm:$0xff]
    %v945 = vld [vmem:[%s934 + $0x50] sm:$0xff]
    %v946 = vld [vmem:[%s934 + $0x58] sm:$0xff]
    %v947 = vld [vmem:[%s934 + $0x60] sm:$0xff]
    %v948 = vld [vmem:[%s934 + $0x68] sm:$0xff]
    %v949 = vld [vmem:[%s934 + $0x70] sm:$0xff]
    %v950 = vld [vmem:[%s934 + $0x78] sm:$0xff]
    %s951 = scalar_lea.vmem %s13, 1
    %v952 = vld [vmem:[%s951] sm:$0x1]
    %v954 = vperm.slane %v952, 0
    %956 = vmatpush.msra.mxu0 %v950
    %957 = vmatpush.msra.mxu0 %v949
    %958 = vmatpush.msra.mxu0 %v948
    %959 = vmatpush.msra.mxu0 %v947
    %960 = vmatpush.msra.mxu0 %v946
    %961 = vmatpush.msra.mxu0 %v945
    %962 = vmatpush.msra.mxu0 %v944
    %963 = vmatpush.msra.mxu0 %v943
    %964 = vmatpush.msra.mxu0 %v942
    %965 = vmatpush.msra.mxu0 %v941
    %966 = vmatpush.msra.mxu0 %v940
    %967 = vmatpush.msra.mxu0 %v939
    %968 = vmatpush.msra.mxu0 %v938
    %969 = vmatpush.msra.mxu0 %v937
    %970 = vmatpush.msra.mxu0 %v936
    %971 = vmatpush.msra.mxu0 %v935
    %972 = vmatmul.f32.gmra.mxu0 %v918
    %v973 = vpop.f32.mrf.mxu0
    %v974 = vadd.f32 %v954, %v973
    %975 = vmatmul.f32.gmra.mxu0 %v919
    %v976 = vpop.f32.mrf.mxu0
    %v977 = vadd.f32 %v954, %v976
    %978 = vmatmul.f32.gmra.mxu0 %v920
    %v979 = vpop.f32.mrf.mxu0
    %v980 = vadd.f32 %v954, %v979
    %981 = vmatmul.f32.gmra.mxu0 %v921
    %v982 = vpop.f32.mrf.mxu0
    %v983 = vadd.f32 %v954, %v982
    %984 = vmatmul.f32.gmra.mxu0 %v922
    %v985 = vpop.f32.mrf.mxu0
    %v986 = vadd.f32 %v954, %v985
    %987 = vmatmul.f32.gmra.mxu0 %v923
    %v988 = vpop.f32.mrf.mxu0
    %v989 = vadd.f32 %v954, %v988
    %990 = vmatmul.f32.gmra.mxu0 %v924
    %v991 = vpop.f32.mrf.mxu0
    %v992 = vadd.f32 %v954, %v991
    %993 = vmatmul.f32.gmra.mxu0 %v925
    %v994 = vpop.f32.mrf.mxu0
    %v995 = vadd.f32 %v954, %v994
    %996 = vmatmul.f32.gmra.mxu0 %v926
    %v997 = vpop.f32.mrf.mxu0
    %v998 = vadd.f32 %v954, %v997
    %999 = vmatmul.f32.gmra.mxu0 %v927
    %v1000 = vpop.f32.mrf.mxu0
    %v1001 = vadd.f32 %v954, %v1000
    %1002 = vmatmul.f32.gmra.mxu0 %v928
    %v1003 = vpop.f32.mrf.mxu0
    %v1004 = vadd.f32 %v954, %v1003
    %1005 = vmatmul.f32.gmra.mxu0 %v929
    %v1006 = vpop.f32.mrf.mxu0
    %v1007 = vadd.f32 %v954, %v1006
    %1008 = vmatmul.f32.gmra.mxu0 %v930
    %v1009 = vpop.f32.mrf.mxu0
    %v1010 = vadd.f32 %v954, %v1009
    %1011 = vmatmul.f32.gmra.mxu0 %v931
    %v1012 = vpop.f32.mrf.mxu0
    %v1013 = vadd.f32 %v954, %v1012
    %1014 = vmatmul.f32.gmra.mxu0 %v932
    %v1015 = vpop.f32.mrf.mxu0
    %v1016 = vadd.f32 %v954, %v1015
    %1017 = vmatmul.f32.gmra.mxu0 %v933
    %v1018 = vpop.f32.mrf.mxu0
    %v1019 = vadd.f32 %v954, %v1018
    %1020 = vdwg.mxu0
    %v1021 = vmax.f32 %v974, 0.0
    %v1022 = vmax.f32 %v977, 0.0
    %v1023 = vmax.f32 %v980, 0.0
    %v1024 = vmax.f32 %v983, 0.0
    %v1025 = vmax.f32 %v986, 0.0
    %v1026 = vmax.f32 %v989, 0.0
    %v1027 = vmax.f32 %v992, 0.0
    %v1028 = vmax.f32 %v995, 0.0
    %v1029 = vmax.f32 %v998, 0.0
    %v1030 = vmax.f32 %v1001, 0.0
    %v1031 = vmax.f32 %v1004, 0.0
    %v1032 = vmax.f32 %v1007, 0.0
    %v1033 = vmax.f32 %v1010, 0.0
    %v1034 = vmax.f32 %v1013, 0.0
    %v1035 = vmax.f32 %v1016, 0.0
    %v1036 = vmax.f32 %v1019, 0.0
    %v1037 = vld [vmem:[%s5] sm:$0xf]
    %v1038 = vld [vmem:[%s5 + $0x4] sm:$0xf]
    %v1039 = vld [vmem:[%s5 + $0x8] sm:$0xf]
    %v1040 = vld [vmem:[%s5 + $0xc] sm:$0xf]
    %v1041 = vld [vmem:[%s5 + $0x10] sm:$0xf]
    %v1042 = vld [vmem:[%s5 + $0x14] sm:$0xf]
    %v1043 = vld [vmem:[%s5 + $0x18] sm:$0xf]
    %v1044 = vld [vmem:[%s5 + $0x1c] sm:$0xf]
    %v1045 = vld [vmem:[%s5 + $0x20] sm:$0xf]
    %v1046 = vld [vmem:[%s5 + $0x24] sm:$0xf]
    %v1047 = vld [vmem:[%s5 + $0x28] sm:$0xf]
    %v1048 = vld [vmem:[%s5 + $0x2c] sm:$0xf]
    %v1049 = vld [vmem:[%s5 + $0x30] sm:$0xf]
    %v1050 = vld [vmem:[%s5 + $0x34] sm:$0xf]
    %v1051 = vld [vmem:[%s5 + $0x38] sm:$0xf]
    %v1052 = vld [vmem:[%s5 + $0x3c] sm:$0xf]
    %v1053 = vunpack.c.l.bf16 %v1037
    %v1054 = vunpack.c.l.bf16 %v1038
    %v1055 = vunpack.c.l.bf16 %v1039
    %v1056 = vunpack.c.l.bf16 %v1040
    %v1057 = vunpack.c.l.bf16 %v1041
    %v1058 = vunpack.c.l.bf16 %v1042
    %v1059 = vunpack.c.l.bf16 %v1043
    %v1060 = vunpack.c.l.bf16 %v1044
    %v1061 = vunpack.c.l.bf16 %v1045
    %v1062 = vunpack.c.l.bf16 %v1046
    %v1063 = vunpack.c.l.bf16 %v1047
    %v1064 = vunpack.c.l.bf16 %v1048
    %v1065 = vunpack.c.l.bf16 %v1049
    %v1066 = vunpack.c.l.bf16 %v1050
    %v1067 = vunpack.c.l.bf16 %v1051
    %v1068 = vunpack.c.l.bf16 %v1052
    %1069 = vxpose.xlu0.b32.start [1/16] %v1053, 128
    %1070 = vxpose.xlu0.b32.cont [2/16] %v1054, 128
    %1071 = vxpose.xlu0.b32.cont [3/16] %v1055, 128
    %1072 = vxpose.xlu0.b32.cont [4/16] %v1056, 128
    %1073 = vxpose.xlu0.b32.cont [5/16] %v1057, 128
    %1074 = vxpose.xlu0.b32.cont [6/16] %v1058, 128
    %1075 = vxpose.xlu0.b32.cont [7/16] %v1059, 128
    %1076 = vxpose.xlu0.b32.cont [8/16] %v1060, 128
    %1077 = vxpose.xlu0.b32.cont [9/16] %v1061, 128
    %1078 = vxpose.xlu0.b32.cont [10/16] %v1062, 128
    %1079 = vxpose.xlu0.b32.cont [11/16] %v1063, 128
    %1080 = vxpose.xlu0.b32.cont [12/16] %v1064, 128
    %1081 = vxpose.xlu0.b32.cont [13/16] %v1065, 128
    %1082 = vxpose.xlu0.b32.cont [14/16] %v1066, 128
    %1083 = vxpose.xlu0.b32.cont [15/16] %v1067, 128
    %1084 = vxpose.xlu0.b32.end [16/16] %v1068, 128
    %v1085 = vpop.trf.xlu0
    %v1086 = vpop.trf.xlu0
    %v1087 = vpop.trf.xlu0
    %v1088 = vpop.trf.xlu0
    %v1089 = vpop.trf.xlu0
    %v1090 = vpop.trf.xlu0
    %v1091 = vpop.trf.xlu0
    %v1092 = vpop.trf.xlu0
    %v1093 = vpop.trf.xlu0
    %v1094 = vpop.trf.xlu0
    %v1095 = vpop.trf.xlu0
    %v1096 = vpop.trf.xlu0
    %v1097 = vpop.trf.xlu0
    %v1098 = vpop.trf.xlu0
    %v1099 = vpop.trf.xlu0
    %v1100 = vpop.trf.xlu0
    %1101 = vmatpush.msra.mxu0 %v1036
    %1102 = vmatpush.msra.mxu0 %v1035
    %1103 = vmatpush.msra.mxu0 %v1034
    %1104 = vmatpush.msra.mxu0 %v1033
    %1105 = vmatpush.msra.mxu0 %v1032
    %1106 = vmatpush.msra.mxu0 %v1031
    %1107 = vmatpush.msra.mxu0 %v1030
    %1108 = vmatpush.msra.mxu0 %v1029
    %1109 = vmatpush.msra.mxu0 %v1028
    %1110 = vmatpush.msra.mxu0 %v1027
    %1111 = vmatpush.msra.mxu0 %v1026
    %1112 = vmatpush.msra.mxu0 %v1025
    %1113 = vmatpush.msra.mxu0 %v1024
    %1114 = vmatpush.msra.mxu0 %v1023
    %1115 = vmatpush.msra.mxu0 %v1022
    %1116 = vmatpush.msra.mxu0 %v1021
    %1117 = vmatmul.f32.gmra.mxu0 %v1085
    %v1118 = vpop.f32.mrf.mxu0
    %v1119 = vadd.f32 0.0, %v1118
    %1120 = vdwg.mxu0
    %1121 = vst [vmem:[%s17] sm:$0xff] %v1119
    %v1122 = vld [vmem:[#allocation6] sm:$0xff]
    %v1123 = vld [vmem:[#allocation6 + $0x8] sm:$0xff]
    %v1124 = vld [vmem:[#allocation6 + $0x10] sm:$0xff]
    %v1125 = vld [vmem:[#allocation6 + $0x18] sm:$0xff]
    %v1126 = vld [vmem:[#allocation6 + $0x20] sm:$0xff]
    %v1127 = vld [vmem:[#allocation6 + $0x28] sm:$0xff]
    %v1128 = vld [vmem:[#allocation6 + $0x30] sm:$0xff]
    %v1129 = vld [vmem:[#allocation6 + $0x38] sm:$0xff]
    %v1130 = vld [vmem:[#allocation6 + $0x40] sm:$0xff]
    %v1131 = vld [vmem:[#allocation6 + $0x48] sm:$0xff]
    %v1132 = vld [vmem:[#allocation6 + $0x50] sm:$0xff]
    %v1133 = vld [vmem:[#allocation6 + $0x58] sm:$0xff]
    %v1134 = vld [vmem:[#allocation6 + $0x60] sm:$0xff]
    %v1135 = vld [vmem:[#allocation6 + $0x68] sm:$0xff]
    %v1136 = vld [vmem:[#allocation6 + $0x70] sm:$0xff]
    %v1137 = vld [vmem:[#allocation6 + $0x78] sm:$0xff]
    %v1138 = vld [vmem:[%s15] sm:$0x1]
    %v1140 = vperm.slane %v1138, 0
    %1142 = vmatpush.msra.mxu0 %v1137
    %1143 = vmatpush.msra.mxu0 %v1136
    %1144 = vmatpush.msra.mxu0 %v1135
    %1145 = vmatpush.msra.mxu0 %v1134
    %1146 = vmatpush.msra.mxu0 %v1133
    %1147 = vmatpush.msra.mxu0 %v1132
    %1148 = vmatpush.msra.mxu0 %v1131
    %1149 = vmatpush.msra.mxu0 %v1130
    %1150 = vmatpush.msra.mxu0 %v1129
    %1151 = vmatpush.msra.mxu0 %v1128
    %1152 = vmatpush.msra.mxu0 %v1127
    %1153 = vmatpush.msra.mxu0 %v1126
    %1154 = vmatpush.msra.mxu0 %v1125
    %1155 = vmatpush.msra.mxu0 %v1124
    %1156 = vmatpush.msra.mxu0 %v1123
    %1157 = vmatpush.msra.mxu0 %v1122
    %1158 = vmatmul.f32.gmra.mxu0 %v1119
    %v1159 = vpop.f32.mrf.mxu0
    %v1160 = vadd.f32 %v1140, %v1159
    %1161 = vdwg.mxu0
    %1162 = vst [vmem:[%s16] sm:$0xff] %v1160
    // Predicated region
    $region78: #{forward.1} parent=1 // pred_check
      _
    $region79: #{forward.1} parent=1 // pred_check_branch
      %1164 = sbr.rel (0) target = $region81
    $region80: #{forward.1} parent=1 // pred_region
      _
    $region81: #{forward.1} parent=1 // pred_fallthru
      _
    // Predicated region
    $region82: #{forward.1} parent=1 // pred_check
      _
    $region83: #{forward.1} parent=1 // pred_check_branch
      %1166 = sbr.rel (0) target = $region85
    $region84: #{forward.1} parent=1 // pred_region
      _
    $region85: #{forward.1} parent=1 // pred_fallthru
      _
    // Predicated region
    $region86: #{forward.1} parent=1 // pred_check
      _
    $region87: #{forward.1} parent=1 // pred_check_branch
      %1168 = sbr.rel (0) target = $region89
    $region88: #{forward.1} parent=1 // pred_region
      _
    $region89: #{forward.1} parent=1 // pred_fallthru
      _
    // Predicated region
    $region90: #{forward.1} parent=1 // pred_check
      _
    $region91: #{forward.1} parent=1 // pred_check_branch
      %1170 = sbr.rel (0) target = $region93
    $region92: #{forward.1} parent=1 // pred_region
      _
    $region93: #{forward.1} parent=1 // pred_fallthru
      _
    %1171 = vsyncpa [#allocation3], 1
    %1172 = vsyncpa [#allocation5], 1

</llo_original>
